<compile_context>
chip_gen: v5e
topology: v5e:2x2
jax: 0.10.0
libtpu: 0.0.40
codegen_flags: <defaults>
</compile_context>

<pallas_src>
import jax
import jax.numpy as jnp
from jax import lax
from jax.experimental import pallas as pl
from jax.experimental.pallas import tpu as pltpu


# ----------------------------- Pallas kernels ------------------------------

def conv_nsl_kernel(wc_ref, px_ref, pa_ref, out_ref):
    """Fused stem conv (im2col matmul) for data & aug_data + NSL term.

    wc_ref:  (Cout, K)           conv weight, K = Cin*KH*KW
    px_ref:  (1, K, tile_hw)     im2col patches of `data`
    pa_ref:  (1, K, tile_hw)     im2col patches of `aug_data`
    out_ref: (1, Cout, tile_hw)  feat + (feat - aug_feat)**2
    """
    wc = wc_ref[...]
    feat = jnp.dot(wc, px_ref[0], preferred_element_type=jnp.float32)
    aug = jnp.dot(wc, pa_ref[0], preferred_element_type=jnp.float32)
    d = feat - aug
    out_ref[0] = feat + d * d


def classifier_kernel(x_ref, w_ref, b_ref, out_ref, acc_ref):
    """Classifier Linear, tiled over the contraction axis F.

    x_ref: (N, tf) feature slice; w_ref: (C, tf) weight slice (RHS transposed
    in the contraction, so cls_w is used in its native (C, F) layout);
    b_ref: (1, C); out_ref / acc_ref: (N, C).
    """
    k = pl.program_id(0)

    @pl.when(k == 0)
    def _init():
        acc_ref[...] = jnp.zeros_like(acc_ref)

    acc_ref[...] += lax.dot_general(
        x_ref[...], w_ref[...],
        dimension_numbers=(((1,), (1,)), ((), ())),
        preferred_element_type=jnp.float32)

    @pl.when(k == pl.num_programs(0) - 1)
    def _finalize():
        out_ref[...] = acc_ref[...] + b_ref[...]


# ------------------------------ wrappers -----------------------------------

def _pick_tile(total, candidates):
    """Largest candidate (all multiples of 128) dividing `total`, else full."""
    for c in candidates:
        if c <= total and total % c == 0:
            return c
    return total


def _conv_nsl(pxt, pat, wc):
    n, k, hw = pxt.shape
    cout = wc.shape[0]
    tile_hw = _pick_tile(hw, (512, 256, 128))
    return pl.pallas_call(
        conv_nsl_kernel,
        out_shape=jax.ShapeDtypeStruct((n, cout, hw), jnp.float32),
        grid=(n, hw // tile_hw),
        in_specs=[
            pl.BlockSpec((cout, k), lambda b, t: (0, 0)),
            pl.BlockSpec((1, k, tile_hw), lambda b, t: (b, 0, t)),
            pl.BlockSpec((1, k, tile_hw), lambda b, t: (b, 0, t)),
        ],
        out_specs=pl.BlockSpec((1, cout, tile_hw), lambda b, t: (b, 0, t)),
        compiler_params=pltpu.CompilerParams(
            dimension_semantics=("parallel", "parallel"),
            vmem_limit_bytes=32 * 1024 * 1024),
    )(wc, pxt, pat)


def _classifier(feat_flat, cls_w, cls_b):
    n, f = feat_flat.shape
    c = cls_w.shape[0]
    tf = _pick_tile(f, (2048, 1024, 512, 256, 128))
    return pl.pallas_call(
        classifier_kernel,
        out_shape=jax.ShapeDtypeStruct((n, c), jnp.float32),
        grid=(f // tf,),
        in_specs=[
            pl.BlockSpec((n, tf), lambda k: (0, k)),
            pl.BlockSpec((c, tf), lambda k: (0, k)),
            pl.BlockSpec((1, c), lambda k: (0, 0)),
        ],
        out_specs=pl.BlockSpec((n, c), lambda k: (0, 0)),
        scratch_shapes=[pltpu.VMEM((n, c), jnp.float32)],
        compiler_params=pltpu.CompilerParams(
            dimension_semantics=("arbitrary",),
            vmem_limit_bytes=32 * 1024 * 1024),
    )(feat_flat, cls_w, cls_b.reshape(1, -1))


def _im2col_t(x_nchw, kh, kw, stride, pad, ho, wo):
    """(N,Cin,H,W) -> (N, Cin*KH*KW, Ho*Wo).

    Column order (ci, ky, kx) matches conv_w.reshape(Cout, -1); row order
    (ho, wo) matches the NCHW spatial flatten -- no patch transpose needed.
    """
    n, cin, _, _ = x_nchw.shape
    xp = jnp.pad(x_nchw, ((0, 0), (0, 0), (pad, pad), (pad, pad)))
    taps = []
    for ky in range(kh):
        for kx in range(kw):
            taps.append(xp[:, :, ky:ky + stride * ho:stride,
                              kx:kx + stride * wo:stride])   # (N,Cin,Ho,Wo)
    p = jnp.stack(taps, axis=2)                 # (N, Cin, KH*KW, Ho, Wo)
    return p.reshape(n, cin * kh * kw, ho * wo)


@jax.jit
def cnn_forward(data, aug_data, conv_w, cls_w, cls_b):
    """Pallas implementation of CNNModel.forward((data, aug_data))."""
    n, cin, h, w = data.shape
    cout, _, kh, kw = conv_w.shape
    stride, pad = 2, 1
    ho = (h + 2 * pad - kh) // stride + 1
    wo = (w + 2 * pad - kw) // stride + 1

    pxt = _im2col_t(data, kh, kw, stride, pad, ho, wo)       # (N, K, Ho*Wo)
    pat = _im2col_t(aug_data, kh, kw, stride, pad, ho, wo)
    wc = conv_w.reshape(cout, cin * kh * kw)                 # (Cout, K)

    # fused stem conv + NSL; output already in NCHW order
    feat = _conv_nsl(pxt, pat, wc)                           # (N, Cout, Ho*Wo)
    feat_flat = feat.reshape(n, cout * ho * wo)              # free reshape

    # classifier: Dropout (eval-mode identity) then Linear (Pallas, F-tiled)
    return _classifier(feat_flat, cls_w, cls_b)


# ------------------------------ reference ----------------------------------

def reference_forward(data, aug_data, conv_w, cls_w, cls_b):
    def features(x):
        return lax.conv_general_dilated(
            x, conv_w, window_strides=(2, 2), padding=((1, 1), (1, 1)),
            dimension_numbers=("NCHW", "OIHW", "NCHW"))
    f = features(data)
    a = features(aug_data)
    f = f + (f - a) ** 2
    f = f.reshape(f.shape[0], -1)
    return f @ cls_w.T + cls_b


# -------------------------------- main --------------------------------------

if __name__ == "__main__":
    key = jax.random.PRNGKey(0)
    k1, k2, k3, k4, k5 = jax.random.split(key, 5)

    N, Cin, H, W = 2, 4, 64, 64          # data_sample.shape[0] -> Cin = 4
    Cout, KH, KW = 40, 3, 3              # replaced stem conv -> 40 channels
    Ho, Wo = H // 2, W // 2
    num_classes = 10                     # len(set(df['label']))
    F = Cout * Ho * Wo                   # flattened feature size

    data = jax.random.normal(k1, (N, Cin, H, W), jnp.float32)
    aug_data = data + 0.1 * jax.random.normal(k2, (N, Cin, H, W), jnp.float32)

    conv_w = 0.1 * jax.random.normal(k3, (Cout, Cin, KH, KW), jnp.float32)
    cls_w = 0.05 * jax.random.normal(k4, (num_classes, F), jnp.float32)
    cls_b = 0.01 * jax.random.normal(k5, (num_classes,), jnp.float32)

    pred = cnn_forward(data, aug_data, conv_w, cls_w, cls_b)
    pred = jax.block_until_ready(pred)

    ref = reference_forward(data, aug_data, conv_w, cls_w, cls_b)
    assert pred.shape == (N, num_classes)
    assert jnp.allclose(pred, ref, rtol=1e-3, atol=1e-3), "mismatch vs reference"

    print("KERNEL_OK")
</pallas_src>

<mosaic_0001>
module attributes {stable_mosaic.version = 11 : i64} {
  func.func @conv_nsl_kernel(%arg0: i32, %arg1: i32, %arg2: memref<40x36xf32, #tpu.memory_space<vmem>>, %arg3: memref<1x36x512xf32, #tpu.memory_space<vmem>>, %arg4: memref<1x36x512xf32, #tpu.memory_space<vmem>>, %arg5: memref<1x40x512xf32, #tpu.memory_space<vmem>>) attributes {dimension_semantics = [#tpu.dimension_semantics<parallel>, #tpu.dimension_semantics<parallel>], iteration_bounds = array<i64: 2, 2>, scalar_prefetch = 0 : i64, scratch_operands = 0 : i64, tpu.core_type = #tpu.core_type<tc>, window_params = [{pipeline_mode = #tpu.pipeline_mode<synchronous>, transform_indices = @transform_0, window_bounds = array<i64: 40, 36>}, {transform_indices = @transform_1, window_bounds = array<i64: 1, 36, 512>}, {transform_indices = @transform_2, window_bounds = array<i64: 1, 36, 512>}, {transform_indices = @transform_3, window_bounds = array<i64: 1, 40, 512>}]} {
    %c0 = arith.constant 0 : index
    %c0_0 = arith.constant 0 : index
    %0 = vector.load %arg2[%c0, %c0_0] : memref<40x36xf32, #tpu.memory_space<vmem>>, vector<40x36xf32>
    %c0_1 = arith.constant 0 : index
    %c0_2 = arith.constant 0 : index
    %c0_3 = arith.constant 0 : index
    %1 = vector.load %arg3[%c0_1, %c0_2, %c0_3] : memref<1x36x512xf32, #tpu.memory_space<vmem>>, vector<1x36x512xf32>
    %2 = vector.shape_cast %1 : vector<1x36x512xf32> to vector<36x512xf32>
    %cst = arith.constant dense<0.000000e+00> : vector<40x512xf32>
    %3 = tpu.matmul %0, %2, %cst {dimension_numbers = #tpu.dot_dimension_numbers<[1], [0], [0], [1], [0, 0, 1, 1], [], []>} : vector<40x36xf32>, vector<36x512xf32>, vector<40x512xf32> -> vector<40x512xf32>
    %c0_4 = arith.constant 0 : index
    %c0_5 = arith.constant 0 : index
    %c0_6 = arith.constant 0 : index
    %4 = vector.load %arg4[%c0_4, %c0_5, %c0_6] : memref<1x36x512xf32, #tpu.memory_space<vmem>>, vector<1x36x512xf32>
    %5 = vector.shape_cast %4 : vector<1x36x512xf32> to vector<36x512xf32>
    %cst_7 = arith.constant dense<0.000000e+00> : vector<40x512xf32>
    %6 = tpu.matmul %0, %5, %cst_7 {dimension_numbers = #tpu.dot_dimension_numbers<[1], [0], [0], [1], [0, 0, 1, 1], [], []>} : vector<40x36xf32>, vector<36x512xf32>, vector<40x512xf32> -> vector<40x512xf32>
    %7 = arith.subf %3, %6 : vector<40x512xf32>
    %8 = arith.mulf %7, %7 : vector<40x512xf32>
    %9 = arith.addf %3, %8 : vector<40x512xf32>
    %c0_8 = arith.constant 0 : index
    %c0_9 = arith.constant 0 : index
    %c0_10 = arith.constant 0 : index
    %10 = vector.load %arg5[%c0_8, %c0_9, %c0_10] : memref<1x40x512xf32, #tpu.memory_space<vmem>>, vector<1x40x512xf32>
    %11 = vector.shape_cast %10 : vector<1x40x512xf32> to vector<40x512xf32>
    %12 = vector.shape_cast %9 : vector<40x512xf32> to vector<1x40x512xf32>
    tpu.vector_store %arg5[%c0_8, %c0_9, %c0_10], %12 {strides = array<i32>} : memref<1x40x512xf32, #tpu.memory_space<vmem>>, vector<1x40x512xf32>,
    return
  }
  func.func @transform_0(%arg0: i32, %arg1: i32) -> (i32, i32) {
    %c0_i32 = arith.constant 0 : i32
    %c0_i32_0 = arith.constant 0 : i32
    %c0_i32_1 = arith.constant 0 : i32
    return %c0_i32, %c0_i32_0 : i32, i32
  }
  func.func @transform_1(%arg0: i32, %arg1: i32) -> (i32, i32, i32) {
    %c0_i32 = arith.constant 0 : i32
    %c0_i32_0 = arith.constant 0 : i32
    return %arg0, %c0_i32, %arg1 : i32, i32, i32
  }
  func.func @transform_2(%arg0: i32, %arg1: i32) -> (i32, i32, i32) {
    %c0_i32 = arith.constant 0 : i32
    %c0_i32_0 = arith.constant 0 : i32
    return %arg0, %c0_i32, %arg1 : i32, i32, i32
  }
  func.func @transform_3(%arg0: i32, %arg1: i32) -> (i32, i32, i32) {
    %c0_i32 = arith.constant 0 : i32
    %c0_i32_0 = arith.constant 0 : i32
    return %arg0, %c0_i32, %arg1 : i32, i32, i32
  }
}

module attributes {stable_mosaic.version = 11 : i64} {
  func.func @classifier_kernel(%arg0: i32, %arg1: memref<2x2048xf32, #tpu.memory_space<vmem>>, %arg2: memref<10x2048xf32, #tpu.memory_space<vmem>>, %arg3: memref<1x10xf32, #tpu.memory_space<vmem>>, %arg4: memref<2x10xf32, #tpu.memory_space<vmem>>, %arg5: memref<2x10xf32, #tpu.memory_space<vmem>>) attributes {dimension_semantics = [#tpu.dimension_semantics<arbitrary>], iteration_bounds = array<i64: 20>, scalar_prefetch = 0 : i64, scratch_operands = 1 : i64, tpu.core_type = #tpu.core_type<tc>, window_params = [{transform_indices = @transform_0, window_bounds = array<i64: 2, 2048>}, {transform_indices = @transform_1, window_bounds = array<i64: 10, 2048>}, {pipeline_mode = #tpu.pipeline_mode<synchronous>, transform_indices = @transform_2, window_bounds = array<i64: 1, 10>}, {pipeline_mode = #tpu.pipeline_mode<synchronous>, transform_indices = @transform_3, window_bounds = array<i64: 2, 10>}]} {
    %c0_i32 = arith.constant 0 : i32
    %0 = arith.cmpi eq, %arg0, %c0_i32 : i32
    %1 = arith.extui %0 : i1 to i32
    %c0_i32_0 = arith.constant 0 : i32
    %2 = arith.cmpi ne, %1, %c0_i32_0 : i32
    scf.if %2 {
      %cst_9 = arith.constant 0.000000e+00 : f32
      %12 = vector.broadcast %cst_9 : f32 to vector<2x10xf32>
      %c0_10 = arith.constant 0 : index
      %c0_11 = arith.constant 0 : index
      %13 = vector.load %arg5[%c0_10, %c0_11] : memref<2x10xf32, #tpu.memory_space<vmem>>, vector<2x10xf32>
      tpu.vector_store %arg5[%c0_10, %c0_11], %12 {strides = array<i32>} : memref<2x10xf32, #tpu.memory_space<vmem>>, vector<2x10xf32>,
    } else {
    }
    %c0 = arith.constant 0 : index
    %c0_1 = arith.constant 0 : index
    %3 = vector.load %arg5[%c0, %c0_1] : memref<2x10xf32, #tpu.memory_space<vmem>>, vector<2x10xf32>
    %c0_2 = arith.constant 0 : index
    %c0_3 = arith.constant 0 : index
    %4 = vector.load %arg1[%c0_2, %c0_3] : memref<2x2048xf32, #tpu.memory_space<vmem>>, vector<2x2048xf32>
    %c0_4 = arith.constant 0 : index
    %c0_5 = arith.constant 0 : index
    %5 = vector.load %arg2[%c0_4, %c0_5] : memref<10x2048xf32, #tpu.memory_space<vmem>>, vector<10x2048xf32>
    %cst = arith.constant dense<0.000000e+00> : vector<2x10xf32>
    %6 = tpu.matmul %4, %5, %cst {dimension_numbers = #tpu.dot_dimension_numbers<[1], [1], [0], [0], [0, 0, 1, 0], [], []>} : vector<2x2048xf32>, vector<10x2048xf32>, vector<2x10xf32> -> vector<2x10xf32>
    %7 = arith.addf %3, %6 : vector<2x10xf32>
    %c0_6 = arith.constant 0 : index
    %c0_7 = arith.constant 0 : index
    %8 = vector.load %arg5[%c0_6, %c0_7] : memref<2x10xf32, #tpu.memory_space<vmem>>, vector<2x10xf32>
    tpu.vector_store %arg5[%c0_6, %c0_7], %7 {strides = array<i32>} : memref<2x10xf32, #tpu.memory_space<vmem>>, vector<2x10xf32>,
    %c19_i32 = arith.constant 19 : i32
    %9 = arith.cmpi eq, %arg0, %c19_i32 : i32
    %10 = arith.extui %9 : i1 to i32
    %c0_i32_8 = arith.constant 0 : i32
    %11 = arith.cmpi ne, %10, %c0_i32_8 : i32
    scf.if %11 {
      %c0_9 = arith.constant 0 : index
      %c0_10 = arith.constant 0 : index
      %12 = vector.load %arg5[%c0_9, %c0_10] : memref<2x10xf32, #tpu.memory_space<vmem>>, vector<2x10xf32>
      %c0_11 = arith.constant 0 : index
      %c0_12 = arith.constant 0 : index
      %13 = vector.load %arg3[%c0_11, %c0_12] : memref<1x10xf32, #tpu.memory_space<vmem>>, vector<1x10xf32>
      %14 = vector.broadcast %13 : vector<1x10xf32> to vector<2x10xf32>
      %15 = arith.addf %12, %14 : vector<2x10xf32>
      %c0_13 = arith.constant 0 : index
      %c0_14 = arith.constant 0 : index
      %16 = vector.load %arg4[%c0_13, %c0_14] : memref<2x10xf32, #tpu.memory_space<vmem>>, vector<2x10xf32>
      tpu.vector_store %arg4[%c0_13, %c0_14], %15 {strides = array<i32>} : memref<2x10xf32, #tpu.memory_space<vmem>>, vector<2x10xf32>,
    } else {
    }
    return
  }
  func.func @transform_0(%arg0: i32) -> (i32, i32) {
    %c0_i32 = arith.constant 0 : i32
    %c0_i32_0 = arith.constant 0 : i32
    return %c0_i32, %arg0 : i32, i32
  }
  func.func @transform_1(%arg0: i32) -> (i32, i32) {
    %c0_i32 = arith.constant 0 : i32
    %c0_i32_0 = arith.constant 0 : i32
    return %c0_i32, %arg0 : i32, i32
  }
  func.func @transform_2(%arg0: i32) -> (i32, i32) {
    %c0_i32 = arith.constant 0 : i32
    %c0_i32_0 = arith.constant 0 : i32
    %c0_i32_1 = arith.constant 0 : i32
    return %c0_i32, %c0_i32_0 : i32, i32
  }
  func.func @transform_3(%arg0: i32) -> (i32, i32) {
    %c0_i32 = arith.constant 0 : i32
    %c0_i32_0 = arith.constant 0 : i32
    %c0_i32_1 = arith.constant 0 : i32
    return %c0_i32, %c0_i32_0 : i32, i32
  }
}

</mosaic_0001>

<llo_original>
// kernel: cnn_forward.2
$region0: #{cnn_forward.2}
  #allocation0 [shape = 'u32[]', space=smem, size = 0x4, offset = 0x4, fixed_abs, tag = 'smem constant byte address 0x4 - core index']
  #allocation1 [shape = 'u32[72,128]{1,0:T(1,128)}', space=vmem, size = 0x9000, scoped, tag = 'internal scratch']
  %s0 = inlined_call_operand.vmem [shape: f32[40,36], index: 0, kind: input, shape index: {}]
  %s1 = inlined_call_operand.vmem [shape: f32[2,36,1024], index: 1, kind: input, shape index: {}]
  %s2 = inlined_call_operand.vmem [shape: f32[2,36,1024], index: 2, kind: input, shape index: {}]
  %s3 = inlined_call_operand.vmem [shape: f32[2,40,1024], index: 3, kind: output, shape index: {}]
  %s4 = sld [smem:[#allocation0]]
  $region110: #{cnn_forward.2} parent=0
    _
  %s6 = ssub.s32 1, %s4
  %s7 = scalar_select 0, %s6, %s4
  $region1: #{cnn_forward.2} parent=0
    #allocation2 [shape = 'u8[163840]{0}', space=vmem, size = 0x28000, scoped, tag = 'input window, operand 1']
    #allocation3 [shape = 'u8[163840]{0}', space=vmem, size = 0x28000, scoped, tag = 'input window, operand 2']
    #allocation4 [shape = 'u8[163840]{0}', space=vmem, size = 0x28000, scoped, tag = 'output window, operand 0']
    loop: start=0, step=1, limit=6
    $region2: #{cnn_forward.2} parent=1 // loop_pre_header
      _
    $region3: #{cnn_forward.2} parent=1 // loop_header
      %s9 = sphi 0, %s13
      %p10 = scmp.ge.s32.totalorder %s9, 6
      %s16 = sphi 0, %s28
      %s17 = sphi 0, %s24
      %s18 = sphi 0, %s16
      %s19 = sphi 0, %s17
      %s20 = sphi 0, %s18
      %s21 = sphi 0, %s19
      %s29 = sphi 0, %s29
      %s31 = sphi 0, %s29
      %s32 = sphi 0, %s31
      %s46 = sphi 0, %s32
      %s54 = sphi 0, %s56
      %s57 = sphi 0, %s54
      %s58 = sphi 0, %s57
      %s74 = sphi 0, %s58
      %s82 = sphi 0, %s84
      %s85 = sphi 0, %s82
      %s86 = sphi 0, %s85
      %s102 = sphi 0, %s86
      %s110 = sphi 0, %s112
      %s113 = sphi 0, %s110
      %s114 = sphi 0, %s113
      %s130 = sphi 0, %s114
    $region4: #{cnn_forward.2} parent=1 // loop_header_branch
      %12 = sbr.rel (%p10) target = $region8
    $region5: #{cnn_forward.2} parent=1 // loop_body
      %s14 = ssub.s32 %s9, 1
      %s15 = ssub.s32 %s9, 2
      %s22 = sadd.s32 1, %s17
      %p23 = scmp.ge.s32.totalorder %s22, 2
      %s24 = scalar_select %p23, 0, %s22
      %s25 = sadd.s32 1, %s16
      %s26 = scalar_select %p23, %s25, %s16
      %p27 = scmp.ge.s32.totalorder %s26, 2
      %s28 = scalar_select %p27, 0, %s26
      %s30 = sadd.s32 %s29, 1
      %p33 = scmp.eq.s32.totalorder %s9, 3
      %p34 = scmp.ne.s32.totalorder %s29, %s31
      %p35 = scmp.eq.s32.totalorder %s9, 0
      %p36 = por %p34, %p35
      %p37 = scmp.ne.s32.totalorder %s29, %s31
      %p38 = scmp.eq.s32.totalorder %s14, 3
      %p39 = por %p37, %p38
      %p40 = scmp.ne.s32.totalorder %s31, %s32
      %p41 = scmp.eq.s32.totalorder %s14, 0
      %p42 = por %p40, %p41
      %p43 = scmp.ne.s32.totalorder %s31, %s32
      %p44 = scmp.eq.s32.totalorder %s15, 3
      %p45 = por %p43, %p44
      %p47 = scmp.ne.s32.totalorder %s32, %s46
      %p48 = scmp.eq.s32.totalorder %s15, 0
      %p49 = por %p47, %p48
      %s50 = ssub.s32 %s16, %s28
      %s51 = ssub.s32 %s17, %s24
      %s52 = sor.u32 %s50, %s51
      %p53 = scmp.eq.s32.totalorder %s52, 0
      %s55 = sadd.s32 %s54, 1
      %s56 = scalar_select %p53, %s54, %s55
      %p59 = pneg %p53
      %p60 = scmp.eq.s32.totalorder %s9, 3
      %p61 = por %p59, %p60
      %p62 = scmp.ne.s32.totalorder %s54, %s57
      %p63 = scmp.eq.s32.totalorder %s9, 0
      %p64 = por %p62, %p63
      %p65 = scmp.ne.s32.totalorder %s54, %s57
      %p66 = scmp.eq.s32.totalorder %s14, 3
      %p67 = por %p65, %p66
      %p68 = scmp.ne.s32.totalorder %s57, %s58
      %p69 = scmp.eq.s32.totalorder %s14, 0
      %p70 = por %p68, %p69
      %p71 = scmp.ne.s32.totalorder %s57, %s58
      %p72 = scmp.eq.s32.totalorder %s15, 3
      %p73 = por %p71, %p72
      %p75 = scmp.ne.s32.totalorder %s58, %s74
      %p76 = scmp.eq.s32.totalorder %s15, 0
      %p77 = por %p75, %p76
      %s78 = ssub.s32 %s16, %s28
      %s79 = ssub.s32 %s17, %s24
      %s80 = sor.u32 %s78, %s79
      %p81 = scmp.eq.s32.totalorder %s80, 0
      %s83 = sadd.s32 %s82, 1
      %s84 = scalar_select %p81, %s82, %s83
      %p87 = pneg %p81
      %p88 = scmp.eq.s32.totalorder %s9, 3
      %p89 = por %p87, %p88
      %p90 = scmp.ne.s32.totalorder %s82, %s85
      %p91 = scmp.eq.s32.totalorder %s9, 0
      %p92 = por %p90, %p91
      %p93 = scmp.ne.s32.totalorder %s82, %s85
      %p94 = scmp.eq.s32.totalorder %s14, 3
      %p95 = por %p93, %p94
      %p96 = scmp.ne.s32.totalorder %s85, %s86
      %p97 = scmp.eq.s32.totalorder %s14, 0
      %p98 = por %p96, %p97
      %p99 = scmp.ne.s32.totalorder %s85, %s86
      %p100 = scmp.eq.s32.totalorder %s15, 3
      %p101 = por %p99, %p100
      %p103 = scmp.ne.s32.totalorder %s86, %s102
      %p104 = scmp.eq.s32.totalorder %s15, 0
      %p105 = por %p103, %p104
      %s106 = ssub.s32 %s16, %s28
      %s107 = ssub.s32 %s17, %s24
      %s108 = sor.u32 %s106, %s107
      %p109 = scmp.eq.s32.totalorder %s108, 0
      %s111 = sadd.s32 %s110, 1
      %s112 = scalar_select %p109, %s110, %s111
      %p115 = pneg %p109
      %p116 = scmp.eq.s32.totalorder %s9, 3
      %p117 = por %p115, %p116
      %p118 = scmp.ne.s32.totalorder %s110, %s113
      %p119 = scmp.eq.s32.totalorder %s9, 0
      %p120 = por %p118, %p119
      %p121 = scmp.ne.s32.totalorder %s110, %s113
      %p122 = scmp.eq.s32.totalorder %s14, 3
      %p123 = por %p121, %p122
      %p124 = scmp.ne.s32.totalorder %s113, %s114
      %p125 = scmp.eq.s32.totalorder %s14, 0
      %p126 = por %p124, %p125
      %p127 = scmp.ne.s32.totalorder %s113, %s114
      %p128 = scmp.eq.s32.totalorder %s15, 3
      %p129 = por %p127, %p128
      %p131 = scmp.ne.s32.totalorder %s114, %s130
      %p132 = scmp.eq.s32.totalorder %s15, 0
      %p133 = por %p131, %p132
      %p134 = scmp.le.s32.totalorder 1, %s9
      %p135 = scmp.lt.s32.totalorder %s9, 5
      %p136 = pnand %p134, %p135
      %p137 = pneg %p136
      // Predicated region
      $region9: #{cnn_forward.2} parent=5 // pred_check
        _
      $region10: #{cnn_forward.2} parent=5 // pred_check_branch
        %139 = sbr.rel (%p136) target = $region12
      $region11: #{cnn_forward.2} parent=5 // pred_region
        %s140 = ssub.s32 %s9, 1
        // Predicated region
        $region13: #{cnn_forward.2} parent=11 // pred_check
          %p141 = pneg %p42
        $region14: #{cnn_forward.2} parent=11 // pred_check_branch
          %143 = sbr.rel (%p141) target = $region16
        $region15: #{cnn_forward.2} parent=11 // pred_region
          _
        $region16: #{cnn_forward.2} parent=11 // pred_fallthru
          _
      $region12: #{cnn_forward.2} parent=5 // pred_fallthru
        _
      %p144 = scmp.lt.s32.totalorder %s9, 4
      // Predicated region
      $region17: #{cnn_forward.2} parent=5 // pred_check
        %p145 = pneg %p144
      $region18: #{cnn_forward.2} parent=5 // pred_check_branch
        %147 = sbr.rel (%p145) target = $region20
      $region19: #{cnn_forward.2} parent=5 // pred_region
        // Predicated region
        $region21: #{cnn_forward.2} parent=19 // pred_check
          %p148 = pneg %p64
        $region22: #{cnn_forward.2} parent=19 // pred_check_branch
          %150 = sbr.rel (%p148) target = $region24
        $region23: #{cnn_forward.2} parent=19 // pred_region
          %s151 = sand.u32 %s54, 1
          %s152 = sand.u32 %s54, 1
          %s153 = smul.addr %s152, 160
          %s154 = scalar_lea.vmem [#allocation2], %s153
          %s155 = smul.u32 4, %s17
          %s156 = smul.addr %s16, 40
          %s157 = sadd.s32 %s155, %s156
          %s158 = smul.addr %s157, 8
          %s159 = scalar_lea.vmem %s1, %s158
          // Predicated region
          $region25: #{cnn_forward.2} parent=23 // pred_check
            _
          $region26: #{cnn_forward.2} parent=23 // pred_check_branch
            %161 = sbr.rel (0) target = $region28
          $region27: #{cnn_forward.2} parent=23 // pred_region
            // Predicated region
            $region29: #{cnn_forward.2} parent=27 // pred_check
              _
            $region30: #{cnn_forward.2} parent=27 // pred_check_branch
              %163 = sbr.rel (0) target = $region32
            $region31: #{cnn_forward.2} parent=27 // pred_region
              loop: start=0, step=1, limit=1
              $region33: #{cnn_forward.2} parent=31 // loop_pre_header
                _
              $region34: #{cnn_forward.2} parent=31 // loop_header
                %s165 = sphi 0, %s169
                %p166 = scmp.ge.s32.totalorder %s165, 1
                %s170 = sphi %s159, %s159
                %s171 = sphi %s154, %s154
              $region35: #{cnn_forward.2} parent=31 // loop_header_branch
                %168 = sbr.rel (%p166) target = $region39
              $region36: #{cnn_forward.2} parent=31 // loop_body
                %v172 = vld [vmem:[%s170] sm:$0xff]
                %173 = vst [vmem:[%s171] sm:$0xff] %v172
                %v174 = vld [vmem:[%s170 + $0x8] sm:$0xff]
                %175 = vst [vmem:[%s171 + $0x8] sm:$0xff] %v174
                %v176 = vld [vmem:[%s170 + $0x10] sm:$0xff]
                %177 = vst [vmem:[%s171 + $0x10] sm:$0xff] %v176
                %v178 = vld [vmem:[%s170 + $0x18] sm:$0xff]
                %179 = vst [vmem:[%s171 + $0x18] sm:$0xff] %v178
                %v180 = vld [vmem:[%s170 + $0x40] sm:$0xff]
                %181 = vst [vmem:[%s171 + $0x20] sm:$0xff] %v180
                %v182 = vld [vmem:[%s170 + $0x48] sm:$0xff]
                %183 = vst [vmem:[%s171 + $0x28] sm:$0xff] %v182
                %v184 = vld [vmem:[%s170 + $0x50] sm:$0xff]
                %185 = vst [vmem:[%s171 + $0x30] sm:$0xff] %v184
                %v186 = vld [vmem:[%s170 + $0x58] sm:$0xff]
                %187 = vst [vmem:[%s171 + $0x38] sm:$0xff] %v186
                %v188 = vld [vmem:[%s170 + $0x80] sm:$0xff]
                %189 = vst [vmem:[%s171 + $0x40] sm:$0xff] %v188
                %v190 = vld [vmem:[%s170 + $0x88] sm:$0xff]
                %191 = vst [vmem:[%s171 + $0x48] sm:$0xff] %v190
                %v192 = vld [vmem:[%s170 + $0x90] sm:$0xff]
                %193 = vst [vmem:[%s171 + $0x50] sm:$0xff] %v192
                %v194 = vld [vmem:[%s170 + $0x98] sm:$0xff]
                %195 = vst [vmem:[%s171 + $0x58] sm:$0xff] %v194
                %v196 = vld [vmem:[%s170 + $0xc0] sm:$0xff]
                %197 = vst [vmem:[%s171 + $0x60] sm:$0xff] %v196
                %v198 = vld [vmem:[%s170 + $0xc8] sm:$0xff]
                %199 = vst [vmem:[%s171 + $0x68] sm:$0xff] %v198
                %v200 = vld [vmem:[%s170 + $0xd0] sm:$0xff]
                %201 = vst [vmem:[%s171 + $0x70] sm:$0xff] %v200
                %v202 = vld [vmem:[%s170 + $0xd8] sm:$0xff]
                %203 = vst [vmem:[%s171 + $0x78] sm:$0xff] %v202
                %v204 = vld [vmem:[%s170 + $0x100] sm:$0xff]
                %205 = vst [vmem:[%s171 + $0x80] sm:$0xff] %v204
                %v206 = vld [vmem:[%s170 + $0x108] sm:$0xff]
                %207 = vst [vmem:[%s171 + $0x88] sm:$0xff] %v206
                %v208 = vld [vmem:[%s170 + $0x110] sm:$0xff]
                %209 = vst [vmem:[%s171 + $0x90] sm:$0xff] %v208
                %v210 = vld [vmem:[%s170 + $0x118] sm:$0xff]
                %211 = vst [vmem:[%s171 + $0x98] sm:$0xff] %v210
              $region37: #{cnn_forward.2} parent=31 // loop_footer
                %s169 = sadd.s32 1, %s165
              $region38: #{cnn_forward.2} parent=31 // loop_footer_branch
                %164 = sbr.rel target = $region34
              $region39: #{cnn_forward.2} parent=31 // loop_exit
                _
            $region32: #{cnn_forward.2} parent=27 // pred_fallthru
              _
            // Predicated region
            $region40: #{cnn_forward.2} parent=27 // pred_check
              _
            $region41: #{cnn_forward.2} parent=27 // pred_check_branch
              %213 = sbr.rel target = $region43
            $region42: #{cnn_forward.2} parent=27 // pred_region
              _
            $region43: #{cnn_forward.2} parent=27 // pred_fallthru
              _
          $region28: #{cnn_forward.2} parent=23 // pred_fallthru
            _
          %214 = vnop
        $region24: #{cnn_forward.2} parent=19 // pred_fallthru
          _
        // Predicated region
        $region44: #{cnn_forward.2} parent=19 // pred_check
          %p215 = pneg %p92
        $region45: #{cnn_forward.2} parent=19 // pred_check_branch
          %217 = sbr.rel (%p215) target = $region47
        $region46: #{cnn_forward.2} parent=19 // pred_region
          %s218 = sand.u32 %s82, 1
          %s219 = sand.u32 %s82, 1
          %s220 = smul.addr %s219, 160
          %s221 = scalar_lea.vmem [#allocation3], %s220
          %s222 = smul.u32 4, %s17
          %s223 = smul.addr %s16, 40
          %s224 = sadd.s32 %s222, %s223
          %s225 = smul.addr %s224, 8
          %s226 = scalar_lea.vmem %s2, %s225
          // Predicated region
          $region48: #{cnn_forward.2} parent=46 // pred_check
            _
          $region49: #{cnn_forward.2} parent=46 // pred_check_branch
            %228 = sbr.rel (0) target = $region51
          $region50: #{cnn_forward.2} parent=46 // pred_region
            // Predicated region
            $region52: #{cnn_forward.2} parent=50 // pred_check
              _
            $region53: #{cnn_forward.2} parent=50 // pred_check_branch
              %230 = sbr.rel (0) target = $region55
            $region54: #{cnn_forward.2} parent=50 // pred_region
              loop: start=0, step=1, limit=1
              $region56: #{cnn_forward.2} parent=54 // loop_pre_header
                _
              $region57: #{cnn_forward.2} parent=54 // loop_header
                %s232 = sphi 0, %s236
                %p233 = scmp.ge.s32.totalorder %s232, 1
                %s237 = sphi %s226, %s226
                %s238 = sphi %s221, %s221
              $region58: #{cnn_forward.2} parent=54 // loop_header_branch
                %235 = sbr.rel (%p233) target = $region62
              $region59: #{cnn_forward.2} parent=54 // loop_body
                %v239 = vld [vmem:[%s237] sm:$0xff]
                %240 = vst [vmem:[%s238] sm:$0xff] %v239
                %v241 = vld [vmem:[%s237 + $0x8] sm:$0xff]
                %242 = vst [vmem:[%s238 + $0x8] sm:$0xff] %v241
                %v243 = vld [vmem:[%s237 + $0x10] sm:$0xff]
                %244 = vst [vmem:[%s238 + $0x10] sm:$0xff] %v243
                %v245 = vld [vmem:[%s237 + $0x18] sm:$0xff]
                %246 = vst [vmem:[%s238 + $0x18] sm:$0xff] %v245
                %v247 = vld [vmem:[%s237 + $0x40] sm:$0xff]
                %248 = vst [vmem:[%s238 + $0x20] sm:$0xff] %v247
                %v249 = vld [vmem:[%s237 + $0x48] sm:$0xff]
                %250 = vst [vmem:[%s238 + $0x28] sm:$0xff] %v249
                %v251 = vld [vmem:[%s237 + $0x50] sm:$0xff]
                %252 = vst [vmem:[%s238 + $0x30] sm:$0xff] %v251
                %v253 = vld [vmem:[%s237 + $0x58] sm:$0xff]
                %254 = vst [vmem:[%s238 + $0x38] sm:$0xff] %v253
                %v255 = vld [vmem:[%s237 + $0x80] sm:$0xff]
                %256 = vst [vmem:[%s238 + $0x40] sm:$0xff] %v255
                %v257 = vld [vmem:[%s237 + $0x88] sm:$0xff]
                %258 = vst [vmem:[%s238 + $0x48] sm:$0xff] %v257
                %v259 = vld [vmem:[%s237 + $0x90] sm:$0xff]
                %260 = vst [vmem:[%s238 + $0x50] sm:$0xff] %v259
                %v261 = vld [vmem:[%s237 + $0x98] sm:$0xff]
                %262 = vst [vmem:[%s238 + $0x58] sm:$0xff] %v261
                %v263 = vld [vmem:[%s237 + $0xc0] sm:$0xff]
                %264 = vst [vmem:[%s238 + $0x60] sm:$0xff] %v263
                %v265 = vld [vmem:[%s237 + $0xc8] sm:$0xff]
                %266 = vst [vmem:[%s238 + $0x68] sm:$0xff] %v265
                %v267 = vld [vmem:[%s237 + $0xd0] sm:$0xff]
                %268 = vst [vmem:[%s238 + $0x70] sm:$0xff] %v267
                %v269 = vld [vmem:[%s237 + $0xd8] sm:$0xff]
                %270 = vst [vmem:[%s238 + $0x78] sm:$0xff] %v269
                %v271 = vld [vmem:[%s237 + $0x100] sm:$0xff]
                %272 = vst [vmem:[%s238 + $0x80] sm:$0xff] %v271
                %v273 = vld [vmem:[%s237 + $0x108] sm:$0xff]
                %274 = vst [vmem:[%s238 + $0x88] sm:$0xff] %v273
                %v275 = vld [vmem:[%s237 + $0x110] sm:$0xff]
                %276 = vst [vmem:[%s238 + $0x90] sm:$0xff] %v275
                %v277 = vld [vmem:[%s237 + $0x118] sm:$0xff]
                %278 = vst [vmem:[%s238 + $0x98] sm:$0xff] %v277
              $region60: #{cnn_forward.2} parent=54 // loop_footer
                %s236 = sadd.s32 1, %s232
              $region61: #{cnn_forward.2} parent=54 // loop_footer_branch
                %231 = sbr.rel target = $region57
              $region62: #{cnn_forward.2} parent=54 // loop_exit
                _
            $region55: #{cnn_forward.2} parent=50 // pred_fallthru
              _
            // Predicated region
            $region63: #{cnn_forward.2} parent=50 // pred_check
              _
            $region64: #{cnn_forward.2} parent=50 // pred_check_branch
              %280 = sbr.rel target = $region66
            $region65: #{cnn_forward.2} parent=50 // pred_region
              _
            $region66: #{cnn_forward.2} parent=50 // pred_fallthru
              _
          $region51: #{cnn_forward.2} parent=46 // pred_fallthru
            _
          %281 = vnop
        $region47: #{cnn_forward.2} parent=19 // pred_fallthru
          _
      $region20: #{cnn_forward.2} parent=5 // pred_fallthru
        _
      %p282 = scmp.le.s32.totalorder 1, %s9
      %p283 = scmp.lt.s32.totalorder %s9, 5
      %p284 = pnand %p282, %p283
      %p285 = pneg %p284
      // Predicated region
      $region67: #{cnn_forward.2} parent=5 // pred_check
        _
      $region68: #{cnn_forward.2} parent=5 // pred_check_branch
        %287 = sbr.rel (%p284) target = $region70
      $region69: #{cnn_forward.2} parent=5 // pred_region
        %s288 = ssub.s32 %s9, 1
        %s289 = sand.u32 %s57, 1
        %s290 = sand.u32 %s57, 1
        %s291 = smul.addr %s290, 160
        %s292 = scalar_lea.vmem [#allocation2], %s291
        // Predicated region
        $region71: #{cnn_forward.2} parent=69 // pred_check
          %p293 = pneg %p70
        $region72: #{cnn_forward.2} parent=69 // pred_check_branch
          %295 = sbr.rel (%p293) target = $region74
        $region73: #{cnn_forward.2} parent=69 // pred_region
          _
        $region74: #{cnn_forward.2} parent=69 // pred_fallthru
          _
        %s296 = sand.u32 %s85, 1
        %s297 = sand.u32 %s85, 1
        %s298 = smul.addr %s297, 160
        %s299 = scalar_lea.vmem [#allocation3], %s298
        // Predicated region
        $region75: #{cnn_forward.2} parent=69 // pred_check
          %p300 = pneg %p98
        $region76: #{cnn_forward.2} parent=69 // pred_check_branch
          %302 = sbr.rel (%p300) target = $region78
        $region77: #{cnn_forward.2} parent=69 // pred_region
          _
        $region78: #{cnn_forward.2} parent=69 // pred_fallthru
          _
        %p303 = pneg %p42
        %p304 = pneg %p39
        %s305 = sand.u32 %s57, 1
        %s306 = sand.u32 %s57, 1
        %s307 = smul.addr %s306, 160
        %s308 = scalar_lea.vmem [#allocation2], %s307
        %p309 = pneg %p70
        %p310 = pneg %p67
        %s311 = sand.u32 %s85, 1
        %s312 = sand.u32 %s85, 1
        %s313 = smul.addr %s312, 160
        %s314 = scalar_lea.vmem [#allocation3], %s313
        %p315 = pneg %p98
        %p316 = pneg %p95
        %p317 = pneg %p126
        %p318 = pneg %p123
        %s319 = sand.u32 %s113, 1
        %s320 = sand.u32 %s113, 1
        %s321 = smul.addr %s320, 160
        %s322 = scalar_lea.vmem [#allocation4], %s321
        %s323 = smul.u32 4, %s19
        %s324 = smul.u32 4, %s19
        %s325 = smul.u32 4, %s19
        %v326 = vld [vmem:[%s0] sm:$0xff]
        %v327 = vld [vmem:[%s0 + $0x8] sm:$0xff]
        %v328 = vld [vmem:[%s0 + $0x10] sm:$0xff]
        %v329 = vld [vmem:[%s0 + $0x18] sm:$0xff]
        %v330 = vld [vmem:[%s0 + $0x20] sm:$0xff]
        %v331 = vld [vmem:[%s292] sm:$0xff]
        %v332 = vld [vmem:[%s292 + $0x8] sm:$0xff]
        %v333 = vld [vmem:[%s292 + $0x10] sm:$0xff]
        %v334 = vld [vmem:[%s292 + $0x18] sm:$0xff]
        %v335 = vld [vmem:[%s292 + $0x20] sm:$0xff]
        %v336 = vld [vmem:[%s292 + $0x28] sm:$0xff]
        %v337 = vld [vmem:[%s292 + $0x30] sm:$0xff]
        %v338 = vld [vmem:[%s292 + $0x38] sm:$0xff]
        %v339 = vld [vmem:[%s292 + $0x40] sm:$0xff]
        %v340 = vld [vmem:[%s292 + $0x48] sm:$0xff]
        %v341 = vld [vmem:[%s292 + $0x50] sm:$0xff]
        %v342 = vld [vmem:[%s292 + $0x58] sm:$0xff]
        %v343 = vld [vmem:[%s292 + $0x60] sm:$0xff]
        %v344 = vld [vmem:[%s292 + $0x68] sm:$0xff]
        %v345 = vld [vmem:[%s292 + $0x70] sm:$0xff]
        %v346 = vld [vmem:[%s292 + $0x78] sm:$0xff]
        %v347 = vld [vmem:[%s292 + $0x80] sm:$0xf]
        %v348 = vld [vmem:[%s292 + $0x88] sm:$0xf]
        %v349 = vld [vmem:[%s292 + $0x90] sm:$0xf]
        %v350 = vld [vmem:[%s292 + $0x98] sm:$0xf]
        %vm351 = vcmask 293888
        %v353 = vsel %vm351, %v326, 0
        %v356 = vsel %vm351, %v327, 0
        %v359 = vsel %vm351, %v328, 0
        %v362 = vsel %vm351, %v329, 0
        %v365 = vsel %vm351, %v330, 0
        %vm367 = vcmask 1043456
        %v369 = vsel %vm367, %v347, 0
        %v372 = vsel %vm367, %v348, 0
        %v375 = vsel %vm367, %v349, 0
        %v378 = vsel %vm367, %v350, 0
        %380 = vmatpush.msra.mxu0 0.0
        %381 = vmatpush.msra.mxu0 0.0
        %382 = vmatpush.msra.mxu0 0.0
        %383 = vmatpush.msra.mxu0 0.0
        %384 = vmatpush.msra.mxu0 0.0
        %385 = vmatpush.msra.mxu0 0.0
        %386 = vmatpush.msra.mxu0 0.0
        %387 = vmatpush.msra.mxu0 0.0
        %388 = vmatpush.msra.mxu0 0.0
        %389 = vmatpush.msra.mxu0 0.0
        %390 = vmatpush.msra.mxu0 0.0
        %391 = vmatpush.msra.mxu0 %v369
        %392 = vmatpush.msra.mxu0 %v343
        %393 = vmatpush.msra.mxu0 %v339
        %394 = vmatpush.msra.mxu0 %v335
        %395 = vmatpush.msra.mxu0 %v331
        %396 = vmatmul.f32.gmra.mxu0 %v353
        %v397 = vpop.f32.mrf.mxu0
        %v398 = vadd.f32 0.0, %v397
        %399 = vmatmul.f32.gmra.mxu0 %v356
        %v400 = vpop.f32.mrf.mxu0
        %v401 = vadd.f32 0.0, %v400
        %402 = vmatmul.f32.gmra.mxu0 %v359
        %v403 = vpop.f32.mrf.mxu0
        %v404 = vadd.f32 0.0, %v403
        %405 = vmatmul.f32.gmra.mxu0 %v362
        %v406 = vpop.f32.mrf.mxu0
        %v407 = vadd.f32 0.0, %v406
        %408 = vmatmul.f32.gmra.mxu0 %v365
        %v409 = vpop.f32.mrf.mxu0
        %v410 = vadd.f32 0.0, %v409
        %411 = vdwg.mxu0
        %412 = vmatpush.msra.mxu0 0.0
        %413 = vmatpush.msra.mxu0 0.0
        %414 = vmatpush.msra.mxu0 0.0
        %415 = vmatpush.msra.mxu0 0.0
        %416 = vmatpush.msra.mxu0 0.0
        %417 = vmatpush.msra.mxu0 0.0
        %418 = vmatpush.msra.mxu0 0.0
        %419 = vmatpush.msra.mxu0 0.0
        %420 = vmatpush.msra.mxu0 0.0
        %421 = vmatpush.msra.mxu0 0.0
        %422 = vmatpush.msra.mxu0 0.0
        %423 = vmatpush.msra.mxu0 %v372
        %424 = vmatpush.msra.mxu0 %v344
        %425 = vmatpush.msra.mxu0 %v340
        %426 = vmatpush.msra.mxu0 %v336
        %427 = vmatpush.msra.mxu0 %v332
        %428 = vmatmul.f32.gmra.mxu0 %v353
        %v429 = vpop.f32.mrf.mxu0
        %v430 = vadd.f32 0.0, %v429
        %431 = vmatmul.f32.gmra.mxu0 %v356
        %v432 = vpop.f32.mrf.mxu0
        %v433 = vadd.f32 0.0, %v432
        %434 = vmatmul.f32.gmra.mxu0 %v359
        %v435 = vpop.f32.mrf.mxu0
        %v436 = vadd.f32 0.0, %v435
        %437 = vmatmul.f32.gmra.mxu0 %v362
        %v438 = vpop.f32.mrf.mxu0
        %v439 = vadd.f32 0.0, %v438
        %440 = vmatmul.f32.gmra.mxu0 %v365
        %v441 = vpop.f32.mrf.mxu0
        %v442 = vadd.f32 0.0, %v441
        %443 = vdwg.mxu0
        %444 = vmatpush.msra.mxu0 0.0
        %445 = vmatpush.msra.mxu0 0.0
        %446 = vmatpush.msra.mxu0 0.0
        %447 = vmatpush.msra.mxu0 0.0
        %448 = vmatpush.msra.mxu0 0.0
        %449 = vmatpush.msra.mxu0 0.0
        %450 = vmatpush.msra.mxu0 0.0
        %451 = vmatpush.msra.mxu0 0.0
        %452 = vmatpush.msra.mxu0 0.0
        %453 = vmatpush.msra.mxu0 0.0
        %454 = vmatpush.msra.mxu0 0.0
        %455 = vmatpush.msra.mxu0 %v375
        %456 = vmatpush.msra.mxu0 %v345
        %457 = vmatpush.msra.mxu0 %v341
        %458 = vmatpush.msra.mxu0 %v337
        %459 = vmatpush.msra.mxu0 %v333
        %460 = vmatmul.f32.gmra.mxu0 %v353
        %v461 = vpop.f32.mrf.mxu0
        %v462 = vadd.f32 0.0, %v461
        %463 = vmatmul.f32.gmra.mxu0 %v356
        %v464 = vpop.f32.mrf.mxu0
        %v465 = vadd.f32 0.0, %v464
        %466 = vmatmul.f32.gmra.mxu0 %v359
        %v467 = vpop.f32.mrf.mxu0
        %v468 = vadd.f32 0.0, %v467
        %469 = vmatmul.f32.gmra.mxu0 %v362
        %v470 = vpop.f32.mrf.mxu0
        %v471 = vadd.f32 0.0, %v470
        %472 = vmatmul.f32.gmra.mxu0 %v365
        %v473 = vpop.f32.mrf.mxu0
        %v474 = vadd.f32 0.0, %v473
        %475 = vdwg.mxu0
        %476 = vmatpush.msra.mxu0 0.0
        %477 = vmatpush.msra.mxu0 0.0
        %478 = vmatpush.msra.mxu0 0.0
        %479 = vmatpush.msra.mxu0 0.0
        %480 = vmatpush.msra.mxu0 0.0
        %481 = vmatpush.msra.mxu0 0.0
        %482 = vmatpush.msra.mxu0 0.0
        %483 = vmatpush.msra.mxu0 0.0
        %484 = vmatpush.msra.mxu0 0.0
        %485 = vmatpush.msra.mxu0 0.0
        %486 = vmatpush.msra.mxu0 0.0
        %487 = vmatpush.msra.mxu0 %v378
        %488 = vmatpush.msra.mxu0 %v346
        %489 = vmatpush.msra.mxu0 %v342
        %490 = vmatpush.msra.mxu0 %v338
        %491 = vmatpush.msra.mxu0 %v334
        %492 = vmatmul.f32.gmra.mxu0 %v353
        %v493 = vpop.f32.mrf.mxu0
        %v494 = vadd.f32 0.0, %v493
        %495 = vmatmul.f32.gmra.mxu0 %v356
        %v496 = vpop.f32.mrf.mxu0
        %v497 = vadd.f32 0.0, %v496
        %498 = vmatmul.f32.gmra.mxu0 %v359
        %v499 = vpop.f32.mrf.mxu0
        %v500 = vadd.f32 0.0, %v499
        %501 = vmatmul.f32.gmra.mxu0 %v362
        %v502 = vpop.f32.mrf.mxu0
        %v503 = vadd.f32 0.0, %v502
        %504 = vmatmul.f32.gmra.mxu0 %v365
        %v505 = vpop.f32.mrf.mxu0
        %v506 = vadd.f32 0.0, %v505
        %507 = vdwg.mxu0
        %v508 = vld [vmem:[%s299] sm:$0xff]
        %v509 = vld [vmem:[%s299 + $0x8] sm:$0xff]
        %v510 = vld [vmem:[%s299 + $0x10] sm:$0xff]
        %v511 = vld [vmem:[%s299 + $0x18] sm:$0xff]
        %v512 = vld [vmem:[%s299 + $0x20] sm:$0xff]
        %v513 = vld [vmem:[%s299 + $0x28] sm:$0xff]
        %v514 = vld [vmem:[%s299 + $0x30] sm:$0xff]
        %v515 = vld [vmem:[%s299 + $0x38] sm:$0xff]
        %v516 = vld [vmem:[%s299 + $0x40] sm:$0xff]
        %v517 = vld [vmem:[%s299 + $0x48] sm:$0xff]
        %v518 = vld [vmem:[%s299 + $0x50] sm:$0xff]
        %v519 = vld [vmem:[%s299 + $0x58] sm:$0xff]
        %v520 = vld [vmem:[%s299 + $0x60] sm:$0xff]
        %v521 = vld [vmem:[%s299 + $0x68] sm:$0xff]
        %v522 = vld [vmem:[%s299 + $0x70] sm:$0xff]
        %v523 = vld [vmem:[%s299 + $0x78] sm:$0xff]
        %v524 = vld [vmem:[%s299 + $0x80] sm:$0xf]
        %v525 = vld [vmem:[%s299 + $0x88] sm:$0xf]
        %v526 = vld [vmem:[%s299 + $0x90] sm:$0xf]
        %v527 = vld [vmem:[%s299 + $0x98] sm:$0xf]
        %v529 = vsel %vm367, %v524, 0
        %v532 = vsel %vm367, %v525, 0
        %v535 = vsel %vm367, %v526, 0
        %v538 = vsel %vm367, %v527, 0
        %540 = vmatpush.msra.mxu0 0.0
        %541 = vmatpush.msra.mxu0 0.0
        %542 = vmatpush.msra.mxu0 0.0
        %543 = vmatpush.msra.mxu0 0.0
        %544 = vmatpush.msra.mxu0 0.0
        %545 = vmatpush.msra.mxu0 0.0
        %546 = vmatpush.msra.mxu0 0.0
        %547 = vmatpush.msra.mxu0 0.0
        %548 = vmatpush.msra.mxu0 0.0
        %549 = vmatpush.msra.mxu0 0.0
        %550 = vmatpush.msra.mxu0 0.0
        %551 = vmatpush.msra.mxu0 %v529
        %552 = vmatpush.msra.mxu0 %v520
        %553 = vmatpush.msra.mxu0 %v516
        %554 = vmatpush.msra.mxu0 %v512
        %555 = vmatpush.msra.mxu0 %v508
        %556 = vmatmul.f32.gmra.mxu0 %v353
        %v557 = vpop.f32.mrf.mxu0
        %v558 = vadd.f32 0.0, %v557
        %559 = vmatmul.f32.gmra.mxu0 %v356
        %v560 = vpop.f32.mrf.mxu0
        %v561 = vadd.f32 0.0, %v560
        %562 = vmatmul.f32.gmra.mxu0 %v359
        %v563 = vpop.f32.mrf.mxu0
        %v564 = vadd.f32 0.0, %v563
        %565 = vmatmul.f32.gmra.mxu0 %v362
        %v566 = vpop.f32.mrf.mxu0
        %v567 = vadd.f32 0.0, %v566
        %568 = vmatmul.f32.gmra.mxu0 %v365
        %v569 = vpop.f32.mrf.mxu0
        %v570 = vadd.f32 0.0, %v569
        %571 = vdwg.mxu0
        %572 = vmatpush.msra.mxu0 0.0
        %573 = vmatpush.msra.mxu0 0.0
        %574 = vmatpush.msra.mxu0 0.0
        %575 = vmatpush.msra.mxu0 0.0
        %576 = vmatpush.msra.mxu0 0.0
        %577 = vmatpush.msra.mxu0 0.0
        %578 = vmatpush.msra.mxu0 0.0
        %579 = vmatpush.msra.mxu0 0.0
        %580 = vmatpush.msra.mxu0 0.0
        %581 = vmatpush.msra.mxu0 0.0
        %582 = vmatpush.msra.mxu0 0.0
        %583 = vmatpush.msra.mxu0 %v532
        %584 = vmatpush.msra.mxu0 %v521
        %585 = vmatpush.msra.mxu0 %v517
        %586 = vmatpush.msra.mxu0 %v513
        %587 = vmatpush.msra.mxu0 %v509
        %588 = vmatmul.f32.gmra.mxu0 %v353
        %v589 = vpop.f32.mrf.mxu0
        %v590 = vadd.f32 0.0, %v589
        %591 = vmatmul.f32.gmra.mxu0 %v356
        %v592 = vpop.f32.mrf.mxu0
        %v593 = vadd.f32 0.0, %v592
        %594 = vmatmul.f32.gmra.mxu0 %v359
        %v595 = vpop.f32.mrf.mxu0
        %v596 = vadd.f32 0.0, %v595
        %597 = vmatmul.f32.gmra.mxu0 %v362
        %v598 = vpop.f32.mrf.mxu0
        %v599 = vadd.f32 0.0, %v598
        %600 = vmatmul.f32.gmra.mxu0 %v365
        %v601 = vpop.f32.mrf.mxu0
        %v602 = vadd.f32 0.0, %v601
        %603 = vdwg.mxu0
        %604 = vmatpush.msra.mxu0 0.0
        %605 = vmatpush.msra.mxu0 0.0
        %606 = vmatpush.msra.mxu0 0.0
        %607 = vmatpush.msra.mxu0 0.0
        %608 = vmatpush.msra.mxu0 0.0
        %609 = vmatpush.msra.mxu0 0.0
        %610 = vmatpush.msra.mxu0 0.0
        %611 = vmatpush.msra.mxu0 0.0
        %612 = vmatpush.msra.mxu0 0.0
        %613 = vmatpush.msra.mxu0 0.0
        %614 = vmatpush.msra.mxu0 0.0
        %615 = vmatpush.msra.mxu0 %v535
        %616 = vmatpush.msra.mxu0 %v522
        %617 = vmatpush.msra.mxu0 %v518
        %618 = vmatpush.msra.mxu0 %v514
        %619 = vmatpush.msra.mxu0 %v510
        %620 = vmatmul.f32.gmra.mxu0 %v353
        %v621 = vpop.f32.mrf.mxu0
        %v622 = vadd.f32 0.0, %v621
        %623 = vmatmul.f32.gmra.mxu0 %v356
        %v624 = vpop.f32.mrf.mxu0
        %v625 = vadd.f32 0.0, %v624
        %626 = vmatmul.f32.gmra.mxu0 %v359
        %v627 = vpop.f32.mrf.mxu0
        %v628 = vadd.f32 0.0, %v627
        %629 = vmatmul.f32.gmra.mxu0 %v362
        %v630 = vpop.f32.mrf.mxu0
        %v631 = vadd.f32 0.0, %v630
        %632 = vmatmul.f32.gmra.mxu0 %v365
        %v633 = vpop.f32.mrf.mxu0
        %v634 = vadd.f32 0.0, %v633
        %635 = vdwg.mxu0
        %636 = vmatpush.msra.mxu0 0.0
        %637 = vmatpush.msra.mxu0 0.0
        %638 = vmatpush.msra.mxu0 0.0
        %639 = vmatpush.msra.mxu0 0.0
        %640 = vmatpush.msra.mxu0 0.0
        %641 = vmatpush.msra.mxu0 0.0
        %642 = vmatpush.msra.mxu0 0.0
        %643 = vmatpush.msra.mxu0 0.0
        %644 = vmatpush.msra.mxu0 0.0
        %645 = vmatpush.msra.mxu0 0.0
        %646 = vmatpush.msra.mxu0 0.0
        %647 = vmatpush.msra.mxu0 %v538
        %648 = vmatpush.msra.mxu0 %v523
        %649 = vmatpush.msra.mxu0 %v519
        %650 = vmatpush.msra.mxu0 %v515
        %651 = vmatpush.msra.mxu0 %v511
        %652 = vmatmul.f32.gmra.mxu0 %v353
        %v653 = vpop.f32.mrf.mxu0
        %v654 = vadd.f32 0.0, %v653
        %655 = vmatmul.f32.gmra.mxu0 %v356
        %v656 = vpop.f32.mrf.mxu0
        %v657 = vadd.f32 0.0, %v656
        %658 = vmatmul.f32.gmra.mxu0 %v359
        %v659 = vpop.f32.mrf.mxu0
        %v660 = vadd.f32 0.0, %v659
        %661 = vmatmul.f32.gmra.mxu0 %v362
        %v662 = vpop.f32.mrf.mxu0
        %v663 = vadd.f32 0.0, %v662
        %664 = vmatmul.f32.gmra.mxu0 %v365
        %v665 = vpop.f32.mrf.mxu0
        %v666 = vadd.f32 0.0, %v665
        %667 = vdwg.mxu0
        %v668 = vsub.f32 %v398, %v558
        %v669 = vsub.f32 %v430, %v590
        %v670 = vsub.f32 %v462, %v622
        %v671 = vsub.f32 %v494, %v654
        %v672 = vsub.f32 %v401, %v561
        %v673 = vsub.f32 %v433, %v593
        %v674 = vsub.f32 %v465, %v625
        %v675 = vsub.f32 %v497, %v657
        %v676 = vsub.f32 %v404, %v564
        %v677 = vsub.f32 %v436, %v596
        %v678 = vsub.f32 %v468, %v628
        %v679 = vsub.f32 %v500, %v660
        %v680 = vsub.f32 %v407, %v567
        %v681 = vsub.f32 %v439, %v599
        %v682 = vsub.f32 %v471, %v631
        %v683 = vsub.f32 %v503, %v663
        %v684 = vsub.f32 %v410, %v570
        %v685 = vsub.f32 %v442, %v602
        %v686 = vsub.f32 %v474, %v634
        %v687 = vsub.f32 %v506, %v666
        %v688 = vmul.f32 %v668, %v668
        %v689 = vmul.f32 %v669, %v669
        %v690 = vmul.f32 %v670, %v670
        %v691 = vmul.f32 %v671, %v671
        %v692 = vmul.f32 %v672, %v672
        %v693 = vmul.f32 %v673, %v673
        %v694 = vmul.f32 %v674, %v674
        %v695 = vmul.f32 %v675, %v675
        %v696 = vmul.f32 %v676, %v676
        %v697 = vmul.f32 %v677, %v677
        %v698 = vmul.f32 %v678, %v678
        %v699 = vmul.f32 %v679, %v679
        %v700 = vmul.f32 %v680, %v680
        %v701 = vmul.f32 %v681, %v681
        %v702 = vmul.f32 %v682, %v682
        %v703 = vmul.f32 %v683, %v683
        %v704 = vmul.f32 %v684, %v684
        %v705 = vmul.f32 %v685, %v685
        %v706 = vmul.f32 %v686, %v686
        %v707 = vmul.f32 %v687, %v687
        %v708 = vadd.f32 %v398, %v688
        %v709 = vadd.f32 %v430, %v689
        %v710 = vadd.f32 %v462, %v690
        %v711 = vadd.f32 %v494, %v691
        %v712 = vadd.f32 %v401, %v692
        %v713 = vadd.f32 %v433, %v693
        %v714 = vadd.f32 %v465, %v694
        %v715 = vadd.f32 %v497, %v695
        %v716 = vadd.f32 %v404, %v696
        %v717 = vadd.f32 %v436, %v697
        %v718 = vadd.f32 %v468, %v698
        %v719 = vadd.f32 %v500, %v699
        %v720 = vadd.f32 %v407, %v700
        %v721 = vadd.f32 %v439, %v701
        %v722 = vadd.f32 %v471, %v702
        %v723 = vadd.f32 %v503, %v703
        %v724 = vadd.f32 %v410, %v704
        %v725 = vadd.f32 %v442, %v705
        %v726 = vadd.f32 %v474, %v706
        %v727 = vadd.f32 %v506, %v707
        %728 = vst [vmem:[%s322] sm:$0xff] %v708
        %729 = vst [vmem:[%s322 + $0x8] sm:$0xff] %v709
        %730 = vst [vmem:[%s322 + $0x10] sm:$0xff] %v710
        %731 = vst [vmem:[%s322 + $0x18] sm:$0xff] %v711
        %732 = vst [vmem:[%s322 + $0x20] sm:$0xff] %v712
        %733 = vst [vmem:[%s322 + $0x28] sm:$0xff] %v713
        %734 = vst [vmem:[%s322 + $0x30] sm:$0xff] %v714
        %735 = vst [vmem:[%s322 + $0x38] sm:$0xff] %v715
        %736 = vst [vmem:[%s322 + $0x40] sm:$0xff] %v716
        %737 = vst [vmem:[%s322 + $0x48] sm:$0xff] %v717
        %738 = vst [vmem:[%s322 + $0x50] sm:$0xff] %v718
        %739 = vst [vmem:[%s322 + $0x58] sm:$0xff] %v719
        %740 = vst [vmem:[%s322 + $0x60] sm:$0xff] %v720
        %741 = vst [vmem:[%s322 + $0x68] sm:$0xff] %v721
        %742 = vst [vmem:[%s322 + $0x70] sm:$0xff] %v722
        %743 = vst [vmem:[%s322 + $0x78] sm:$0xff] %v723
        %744 = vst [vmem:[%s322 + $0x80] sm:$0xff] %v724
        %745 = vst [vmem:[%s322 + $0x88] sm:$0xff] %v725
        %746 = vst [vmem:[%s322 + $0x90] sm:$0xff] %v726
        %747 = vst [vmem:[%s322 + $0x98] sm:$0xff] %v727
        %s748 = sand.u32 %s113, 1
        %s749 = sand.u32 %s113, 1
        %s750 = smul.addr %s749, 160
        %s751 = scalar_lea.vmem [#allocation4], %s750
        // Predicated region
        $region79: #{cnn_forward.2} parent=69 // pred_check
          %p752 = pneg %p123
        $region80: #{cnn_forward.2} parent=69 // pred_check_branch
          %754 = sbr.rel (%p752) target = $region82
        $region81: #{cnn_forward.2} parent=69 // pred_region
          %s755 = smul.u32 4, %s19
          %s756 = smul.addr %s18, 40
          %s757 = sadd.s32 %s755, %s756
          %s758 = smul.addr %s757, 8
          %s759 = scalar_lea.vmem %s3, %s758
          // Predicated region
          $region83: #{cnn_forward.2} parent=81 // pred_check
            _
          $region84: #{cnn_forward.2} parent=81 // pred_check_branch
            %761 = sbr.rel (0) target = $region86
          $region85: #{cnn_forward.2} parent=81 // pred_region
            // Predicated region
            $region87: #{cnn_forward.2} parent=85 // pred_check
              _
            $region88: #{cnn_forward.2} parent=85 // pred_check_branch
              %763 = sbr.rel (0) target = $region90
            $region89: #{cnn_forward.2} parent=85 // pred_region
              loop: start=0, step=1, limit=1
              $region91: #{cnn_forward.2} parent=89 // loop_pre_header
                _
              $region92: #{cnn_forward.2} parent=89 // loop_header
                %s765 = sphi 0, %s769
                %p766 = scmp.ge.s32.totalorder %s765, 1
                %s770 = sphi %s751, %s751
                %s771 = sphi %s759, %s759
              $region93: #{cnn_forward.2} parent=89 // loop_header_branch
                %768 = sbr.rel (%p766) target = $region97
              $region94: #{cnn_forward.2} parent=89 // loop_body
                %v772 = vld [vmem:[%s770] sm:$0xff]
                %773 = vst [vmem:[%s771] sm:$0xff] %v772
                %v774 = vld [vmem:[%s770 + $0x8] sm:$0xff]
                %775 = vst [vmem:[%s771 + $0x8] sm:$0xff] %v774
                %v776 = vld [vmem:[%s770 + $0x10] sm:$0xff]
                %777 = vst [vmem:[%s771 + $0x10] sm:$0xff] %v776
                %v778 = vld [vmem:[%s770 + $0x18] sm:$0xff]
                %779 = vst [vmem:[%s771 + $0x18] sm:$0xff] %v778
                %v780 = vld [vmem:[%s770 + $0x20] sm:$0xff]
                %781 = vst [vmem:[%s771 + $0x40] sm:$0xff] %v780
                %v782 = vld [vmem:[%s770 + $0x28] sm:$0xff]
                %783 = vst [vmem:[%s771 + $0x48] sm:$0xff] %v782
                %v784 = vld [vmem:[%s770 + $0x30] sm:$0xff]
                %785 = vst [vmem:[%s771 + $0x50] sm:$0xff] %v784
                %v786 = vld [vmem:[%s770 + $0x38] sm:$0xff]
                %787 = vst [vmem:[%s771 + $0x58] sm:$0xff] %v786
                %v788 = vld [vmem:[%s770 + $0x40] sm:$0xff]
                %789 = vst [vmem:[%s771 + $0x80] sm:$0xff] %v788
                %v790 = vld [vmem:[%s770 + $0x48] sm:$0xff]
                %791 = vst [vmem:[%s771 + $0x88] sm:$0xff] %v790
                %v792 = vld [vmem:[%s770 + $0x50] sm:$0xff]
                %793 = vst [vmem:[%s771 + $0x90] sm:$0xff] %v792
                %v794 = vld [vmem:[%s770 + $0x58] sm:$0xff]
                %795 = vst [vmem:[%s771 + $0x98] sm:$0xff] %v794
                %v796 = vld [vmem:[%s770 + $0x60] sm:$0xff]
                %797 = vst [vmem:[%s771 + $0xc0] sm:$0xff] %v796
                %v798 = vld [vmem:[%s770 + $0x68] sm:$0xff]
                %799 = vst [vmem:[%s771 + $0xc8] sm:$0xff] %v798
                %v800 = vld [vmem:[%s770 + $0x70] sm:$0xff]
                %801 = vst [vmem:[%s771 + $0xd0] sm:$0xff] %v800
                %v802 = vld [vmem:[%s770 + $0x78] sm:$0xff]
                %803 = vst [vmem:[%s771 + $0xd8] sm:$0xff] %v802
                %v804 = vld [vmem:[%s770 + $0x80] sm:$0xff]
                %805 = vst [vmem:[%s771 + $0x100] sm:$0xff] %v804
                %v806 = vld [vmem:[%s770 + $0x88] sm:$0xff]
                %807 = vst [vmem:[%s771 + $0x108] sm:$0xff] %v806
                %v808 = vld [vmem:[%s770 + $0x90] sm:$0xff]
                %809 = vst [vmem:[%s771 + $0x110] sm:$0xff] %v808
                %v810 = vld [vmem:[%s770 + $0x98] sm:$0xff]
                %811 = vst [vmem:[%s771 + $0x118] sm:$0xff] %v810
              $region95: #{cnn_forward.2} parent=89 // loop_footer
                %s769 = sadd.s32 1, %s765
              $region96: #{cnn_forward.2} parent=89 // loop_footer_branch
                %764 = sbr.rel target = $region92
              $region97: #{cnn_forward.2} parent=89 // loop_exit
                _
            $region90: #{cnn_forward.2} parent=85 // pred_fallthru
              _
            // Predicated region
            $region98: #{cnn_forward.2} parent=85 // pred_check
              _
            $region99: #{cnn_forward.2} parent=85 // pred_check_branch
              %813 = sbr.rel target = $region101
            $region100: #{cnn_forward.2} parent=85 // pred_region
              _
            $region101: #{cnn_forward.2} parent=85 // pred_fallthru
              _
          $region86: #{cnn_forward.2} parent=81 // pred_fallthru
            _
          %814 = vnop
        $region82: #{cnn_forward.2} parent=69 // pred_fallthru
          _
      $region70: #{cnn_forward.2} parent=5 // pred_fallthru
        _
      %p815 = scmp.le.s32.totalorder 2, %s9
      // Predicated region
      $region102: #{cnn_forward.2} parent=5 // pred_check
        %p816 = pneg %p815
      $region103: #{cnn_forward.2} parent=5 // pred_check_branch
        %818 = sbr.rel (%p816) target = $region105
      $region104: #{cnn_forward.2} parent=5 // pred_region
        %s819 = ssub.s32 %s9, 2
        // Predicated region
        $region106: #{cnn_forward.2} parent=104 // pred_check
          %p820 = pneg %p129
        $region107: #{cnn_forward.2} parent=104 // pred_check_branch
          %822 = sbr.rel (%p820) target = $region109
        $region108: #{cnn_forward.2} parent=104 // pred_region
          %s823 = sand.u32 %s114, 1
          %s824 = sand.u32 %s114, 1
          %s825 = smul.addr %s824, 160
          %s826 = scalar_lea.vmem [#allocation4], %s825
        $region109: #{cnn_forward.2} parent=104 // pred_fallthru
          _
      $region105: #{cnn_forward.2} parent=5 // pred_fallthru
        _
    $region6: #{cnn_forward.2} parent=1 // loop_footer
      %s13 = sadd.s32 1, %s9
    $region7: #{cnn_forward.2} parent=1 // loop_footer_branch
      %8 = sbr.rel target = $region3
    $region8: #{cnn_forward.2} parent=1 // loop_exit
      _

// kernel: cnn_forward.3
$region0: #{cnn_forward.3}
  #allocation0 [shape = 'u32[]', space=smem, size = 0x4, offset = 0x4, fixed_abs, tag = 'smem constant byte address 0x4 - core index']
  #allocation1 [shape = 'u32[72,128]{1,0:T(1,128)}', space=vmem, size = 0x9000, scoped, tag = 'internal scratch']
  #allocation2 [shape = 'f32[2,10]{1,0:T(2,128)}', space=vmem, size = 0x400, scoped, tag = 'scratch operand']
  %s0 = inlined_call_operand.vmem [shape: f32[2,40960], index: 0, kind: input, shape index: {}]
  %s1 = inlined_call_operand.vmem [shape: f32[10,40960], index: 1, kind: input, shape index: {}]
  %s2 = inlined_call_operand.vmem [shape: f32[1,10], index: 2, kind: input, shape index: {}]
  %s3 = inlined_call_operand.hbm [shape: f32[2,10], index: 3, kind: output, shape index: {}]
  %s4 = sld [smem:[#allocation0]]
  $region76: #{cnn_forward.3} parent=0
    _
  %s6 = ssub.s32 1, %s4
  %s7 = scalar_select 0, %s6, %s4
  $region1: #{cnn_forward.3} parent=0
    #allocation3 [shape = 'u8[262144]{0}', space=vmem, size = 0x40000, scoped, tag = 'input window, operand 1']
    #allocation4 [shape = 'u8[1024]{0}', space=vmem, size = 0x400, scoped, tag = 'output window, operand 0, single buffered']
    #allocation5 [shape = 's32[2]{0}', space=sflag, size = 0x8, scoped, tag = 'scoped memory for cnn_forward.3']
    %8 = vsyncpa [#allocation5], 0
    loop: start=0, step=1, limit=22
    $region2: #{cnn_forward.3} parent=1 // loop_pre_header
      _
    $region3: #{cnn_forward.3} parent=1 // loop_header
      %s10 = sphi 0, %s14
      %p11 = scmp.ge.s32.totalorder %s10, 22
      %s20 = sphi 0, %s22
      %s23 = sphi 0, %s20
      %s24 = sphi 0, %s23
      %s40 = sphi 0, %s24
      %s46 = sphi 0, %s48
      %s49 = sphi 0, %s46
      %s50 = sphi 0, %s49
      %s66 = sphi 0, %s50
      %s70 = sphi 0, %s70
      %s72 = sphi 0, %s70
      %s73 = sphi 0, %s72
      %s87 = sphi 0, %s73
      %s91 = sphi 0, %s91
      %s93 = sphi 0, %s91
      %s94 = sphi 0, %s93
      %s108 = sphi 0, %s94
    $region4: #{cnn_forward.3} parent=1 // loop_header_branch
      %13 = sbr.rel (%p11) target = $region8
    $region5: #{cnn_forward.3} parent=1 // loop_body
      %s15 = ssub.s32 %s10, 1
      %s16 = ssub.s32 %s10, 2
      %s17 = sadd.s32 %s10, 1
      %s18 = ssub.s32 %s10, %s17
      %p19 = scmp.eq.s32.totalorder %s18, 0
      %s21 = sadd.s32 %s20, 1
      %s22 = scalar_select %p19, %s20, %s21
      %p25 = pneg %p19
      %p26 = scmp.eq.s32.totalorder %s10, 19
      %p27 = por %p25, %p26
      %p28 = scmp.ne.s32.totalorder %s20, %s23
      %p29 = scmp.eq.s32.totalorder %s10, 0
      %p30 = por %p28, %p29
      %p31 = scmp.ne.s32.totalorder %s20, %s23
      %p32 = scmp.eq.s32.totalorder %s15, 19
      %p33 = por %p31, %p32
      %p34 = scmp.ne.s32.totalorder %s23, %s24
      %p35 = scmp.eq.s32.totalorder %s15, 0
      %p36 = por %p34, %p35
      %p37 = scmp.ne.s32.totalorder %s23, %s24
      %p38 = scmp.eq.s32.totalorder %s16, 19
      %p39 = por %p37, %p38
      %p41 = scmp.ne.s32.totalorder %s24, %s40
      %p42 = scmp.eq.s32.totalorder %s16, 0
      %p43 = por %p41, %p42
      %s44 = ssub.s32 %s10, %s17
      %p45 = scmp.eq.s32.totalorder %s44, 0
      %s47 = sadd.s32 %s46, 1
      %s48 = scalar_select %p45, %s46, %s47
      %p51 = pneg %p45
      %p52 = scmp.eq.s32.totalorder %s10, 19
      %p53 = por %p51, %p52
      %p54 = scmp.ne.s32.totalorder %s46, %s49
      %p55 = scmp.eq.s32.totalorder %s10, 0
      %p56 = por %p54, %p55
      %p57 = scmp.ne.s32.totalorder %s46, %s49
      %p58 = scmp.eq.s32.totalorder %s15, 19
      %p59 = por %p57, %p58
      %p60 = scmp.ne.s32.totalorder %s49, %s50
      %p61 = scmp.eq.s32.totalorder %s15, 0
      %p62 = por %p60, %p61
      %p63 = scmp.ne.s32.totalorder %s49, %s50
      %p64 = scmp.eq.s32.totalorder %s16, 19
      %p65 = por %p63, %p64
      %p67 = scmp.ne.s32.totalorder %s50, %s66
      %p68 = scmp.eq.s32.totalorder %s16, 0
      %p69 = por %p67, %p68
      %s71 = sadd.s32 %s70, 1
      %p74 = scmp.eq.s32.totalorder %s10, 19
      %p75 = scmp.ne.s32.totalorder %s70, %s72
      %p76 = scmp.eq.s32.totalorder %s10, 0
      %p77 = por %p75, %p76
      %p78 = scmp.ne.s32.totalorder %s70, %s72
      %p79 = scmp.eq.s32.totalorder %s15, 19
      %p80 = por %p78, %p79
      %p81 = scmp.ne.s32.totalorder %s72, %s73
      %p82 = scmp.eq.s32.totalorder %s15, 0
      %p83 = por %p81, %p82
      %p84 = scmp.ne.s32.totalorder %s72, %s73
      %p85 = scmp.eq.s32.totalorder %s16, 19
      %p86 = por %p84, %p85
      %p88 = scmp.ne.s32.totalorder %s73, %s87
      %p89 = scmp.eq.s32.totalorder %s16, 0
      %p90 = por %p88, %p89
      %s92 = sadd.s32 %s91, 1
      %p95 = scmp.eq.s32.totalorder %s10, 19
      %p96 = scmp.ne.s32.totalorder %s91, %s93
      %p97 = scmp.eq.s32.totalorder %s10, 0
      %p98 = por %p96, %p97
      %p99 = scmp.ne.s32.totalorder %s91, %s93
      %p100 = scmp.eq.s32.totalorder %s15, 19
      %p101 = por %p99, %p100
      %p102 = scmp.ne.s32.totalorder %s93, %s94
      %p103 = scmp.eq.s32.totalorder %s15, 0
      %p104 = por %p102, %p103
      %p105 = scmp.ne.s32.totalorder %s93, %s94
      %p106 = scmp.eq.s32.totalorder %s16, 19
      %p107 = por %p105, %p106
      %p109 = scmp.ne.s32.totalorder %s94, %s108
      %p110 = scmp.eq.s32.totalorder %s16, 0
      %p111 = por %p109, %p110
      %p112 = scmp.le.s32.totalorder 1, %s10
      %p113 = scmp.lt.s32.totalorder %s10, 21
      %p114 = pnand %p112, %p113
      %p115 = pneg %p114
      // Predicated region
      $region9: #{cnn_forward.3} parent=5 // pred_check
        _
      $region10: #{cnn_forward.3} parent=5 // pred_check_branch
        %117 = sbr.rel (%p114) target = $region12
      $region11: #{cnn_forward.3} parent=5 // pred_region
        %s118 = ssub.s32 %s10, 1
        // Predicated region
        $region13: #{cnn_forward.3} parent=11 // pred_check
          %p119 = pneg %p83
        $region14: #{cnn_forward.3} parent=11 // pred_check_branch
          %121 = sbr.rel (%p119) target = $region16
        $region15: #{cnn_forward.3} parent=11 // pred_region
          _
        $region16: #{cnn_forward.3} parent=11 // pred_fallthru
          _
      $region12: #{cnn_forward.3} parent=5 // pred_fallthru
        _
      %p122 = scmp.lt.s32.totalorder %s10, 20
      // Predicated region
      $region17: #{cnn_forward.3} parent=5 // pred_check
        %p123 = pneg %p122
      $region18: #{cnn_forward.3} parent=5 // pred_check_branch
        %125 = sbr.rel (%p123) target = $region20
      $region19: #{cnn_forward.3} parent=5 // pred_region
        // Predicated region
        $region21: #{cnn_forward.3} parent=19 // pred_check
          %p126 = pneg %p30
        $region22: #{cnn_forward.3} parent=19 // pred_check_branch
          %128 = sbr.rel (%p126) target = $region24
        $region23: #{cnn_forward.3} parent=19 // pred_region
          %s129 = smul.u32 16, %s10
          %p130 = scmp.lt.s32.totalorder %s129, 319
          %s131 = scalar_select %p130, %s129, 319
          %s132 = smul.addr %s131, 2
          %s133 = scalar_lea.vmem %s0, %s132
          %s134 = smul.u32 16, %s10
        $region24: #{cnn_forward.3} parent=19 // pred_fallthru
          _
        // Predicated region
        $region25: #{cnn_forward.3} parent=19 // pred_check
          %p135 = pneg %p56
        $region26: #{cnn_forward.3} parent=19 // pred_check_branch
          %137 = sbr.rel (%p135) target = $region28
        $region27: #{cnn_forward.3} parent=19 // pred_region
          %s138 = sand.u32 %s46, 1
          %s139 = sand.u32 %s46, 1
          %s140 = smul.addr %s139, 256
          %s141 = scalar_lea.vmem [#allocation3], %s140
          %s142 = smul.u32 16, %s10
          %s143 = smul.addr %s142, 8
          %s144 = scalar_lea.vmem %s1, %s143
          // Predicated region
          $region29: #{cnn_forward.3} parent=27 // pred_check
            _
          $region30: #{cnn_forward.3} parent=27 // pred_check_branch
            %146 = sbr.rel (0) target = $region32
          $region31: #{cnn_forward.3} parent=27 // pred_region
            // Predicated region
            $region33: #{cnn_forward.3} parent=31 // pred_check
              _
            $region34: #{cnn_forward.3} parent=31 // pred_check_branch
              %148 = sbr.rel (0) target = $region36
            $region35: #{cnn_forward.3} parent=31 // pred_region
              loop: start=0, step=1, limit=1
              $region37: #{cnn_forward.3} parent=35 // loop_pre_header
                _
              $region38: #{cnn_forward.3} parent=35 // loop_header
                %s150 = sphi 0, %s154
                %p151 = scmp.ge.s32.totalorder %s150, 1
                %s155 = sphi %s144, %s144
                %s156 = sphi %s141, %s141
              $region39: #{cnn_forward.3} parent=35 // loop_header_branch
                %153 = sbr.rel (%p151) target = $region43
              $region40: #{cnn_forward.3} parent=35 // loop_body
                %v157 = vld [vmem:[%s155] sm:$0xff]
                %158 = vst [vmem:[%s156] sm:$0xff] %v157
                %v159 = vld [vmem:[%s155 + $0x8] sm:$0xff]
                %160 = vst [vmem:[%s156 + $0x8] sm:$0xff] %v159
                %v161 = vld [vmem:[%s155 + $0x10] sm:$0xff]
                %162 = vst [vmem:[%s156 + $0x10] sm:$0xff] %v161
                %v163 = vld [vmem:[%s155 + $0x18] sm:$0xff]
                %164 = vst [vmem:[%s156 + $0x18] sm:$0xff] %v163
                %v165 = vld [vmem:[%s155 + $0x20] sm:$0xff]
                %166 = vst [vmem:[%s156 + $0x20] sm:$0xff] %v165
                %v167 = vld [vmem:[%s155 + $0x28] sm:$0xff]
                %168 = vst [vmem:[%s156 + $0x28] sm:$0xff] %v167
                %v169 = vld [vmem:[%s155 + $0x30] sm:$0xff]
                %170 = vst [vmem:[%s156 + $0x30] sm:$0xff] %v169
                %v171 = vld [vmem:[%s155 + $0x38] sm:$0xff]
                %172 = vst [vmem:[%s156 + $0x38] sm:$0xff] %v171
                %v173 = vld [vmem:[%s155 + $0x40] sm:$0xff]
                %174 = vst [vmem:[%s156 + $0x40] sm:$0xff] %v173
                %v175 = vld [vmem:[%s155 + $0x48] sm:$0xff]
                %176 = vst [vmem:[%s156 + $0x48] sm:$0xff] %v175
                %v177 = vld [vmem:[%s155 + $0x50] sm:$0xff]
                %178 = vst [vmem:[%s156 + $0x50] sm:$0xff] %v177
                %v179 = vld [vmem:[%s155 + $0x58] sm:$0xff]
                %180 = vst [vmem:[%s156 + $0x58] sm:$0xff] %v179
                %v181 = vld [vmem:[%s155 + $0x60] sm:$0xff]
                %182 = vst [vmem:[%s156 + $0x60] sm:$0xff] %v181
                %v183 = vld [vmem:[%s155 + $0x68] sm:$0xff]
                %184 = vst [vmem:[%s156 + $0x68] sm:$0xff] %v183
                %v185 = vld [vmem:[%s155 + $0x70] sm:$0xff]
                %186 = vst [vmem:[%s156 + $0x70] sm:$0xff] %v185
                %v187 = vld [vmem:[%s155 + $0x78] sm:$0xff]
                %188 = vst [vmem:[%s156 + $0x78] sm:$0xff] %v187
                %v189 = vld [vmem:[%s155 + $0xa00] sm:$0xff]
                %190 = vst [vmem:[%s156 + $0x80] sm:$0xff] %v189
                %v191 = vld [vmem:[%s155 + $0xa08] sm:$0xff]
                %192 = vst [vmem:[%s156 + $0x88] sm:$0xff] %v191
                %v193 = vld [vmem:[%s155 + $0xa10] sm:$0xff]
                %194 = vst [vmem:[%s156 + $0x90] sm:$0xff] %v193
                %v195 = vld [vmem:[%s155 + $0xa18] sm:$0xff]
                %196 = vst [vmem:[%s156 + $0x98] sm:$0xff] %v195
                %v197 = vld [vmem:[%s155 + $0xa20] sm:$0xff]
                %198 = vst [vmem:[%s156 + $0xa0] sm:$0xff] %v197
                %v199 = vld [vmem:[%s155 + $0xa28] sm:$0xff]
                %200 = vst [vmem:[%s156 + $0xa8] sm:$0xff] %v199
                %v201 = vld [vmem:[%s155 + $0xa30] sm:$0xff]
                %202 = vst [vmem:[%s156 + $0xb0] sm:$0xff] %v201
                %v203 = vld [vmem:[%s155 + $0xa38] sm:$0xff]
                %204 = vst [vmem:[%s156 + $0xb8] sm:$0xff] %v203
                %v205 = vld [vmem:[%s155 + $0xa40] sm:$0xff]
                %206 = vst [vmem:[%s156 + $0xc0] sm:$0xff] %v205
                %v207 = vld [vmem:[%s155 + $0xa48] sm:$0xff]
                %208 = vst [vmem:[%s156 + $0xc8] sm:$0xff] %v207
                %v209 = vld [vmem:[%s155 + $0xa50] sm:$0xff]
                %210 = vst [vmem:[%s156 + $0xd0] sm:$0xff] %v209
                %v211 = vld [vmem:[%s155 + $0xa58] sm:$0xff]
                %212 = vst [vmem:[%s156 + $0xd8] sm:$0xff] %v211
                %v213 = vld [vmem:[%s155 + $0xa60] sm:$0xff]
                %214 = vst [vmem:[%s156 + $0xe0] sm:$0xff] %v213
                %v215 = vld [vmem:[%s155 + $0xa68] sm:$0xff]
                %216 = vst [vmem:[%s156 + $0xe8] sm:$0xff] %v215
                %v217 = vld [vmem:[%s155 + $0xa70] sm:$0xff]
                %218 = vst [vmem:[%s156 + $0xf0] sm:$0xff] %v217
                %v219 = vld [vmem:[%s155 + $0xa78] sm:$0xff]
                %220 = vst [vmem:[%s156 + $0xf8] sm:$0xff] %v219
              $region41: #{cnn_forward.3} parent=35 // loop_footer
                %s154 = sadd.s32 1, %s150
              $region42: #{cnn_forward.3} parent=35 // loop_footer_branch
                %149 = sbr.rel target = $region38
              $region43: #{cnn_forward.3} parent=35 // loop_exit
                _
            $region36: #{cnn_forward.3} parent=31 // pred_fallthru
              _
            // Predicated region
            $region44: #{cnn_forward.3} parent=31 // pred_check
              _
            $region45: #{cnn_forward.3} parent=31 // pred_check_branch
              %222 = sbr.rel target = $region47
            $region46: #{cnn_forward.3} parent=31 // pred_region
              _
            $region47: #{cnn_forward.3} parent=31 // pred_fallthru
              _
          $region32: #{cnn_forward.3} parent=27 // pred_fallthru
            _
          %223 = vnop
        $region28: #{cnn_forward.3} parent=19 // pred_fallthru
          _
      $region20: #{cnn_forward.3} parent=5 // pred_fallthru
        _
      %p224 = scmp.le.s32.totalorder 1, %s10
      %p225 = scmp.lt.s32.totalorder %s10, 21
      %p226 = pnand %p224, %p225
      %p227 = pneg %p226
      // Predicated region
      $region48: #{cnn_forward.3} parent=5 // pred_check
        _
      $region49: #{cnn_forward.3} parent=5 // pred_check_branch
        %229 = sbr.rel (%p226) target = $region51
      $region50: #{cnn_forward.3} parent=5 // pred_region
        %s230 = ssub.s32 %s10, 1
        %s231 = sand.u32 %s49, 1
        %s232 = sand.u32 %s49, 1
        %s233 = smul.addr %s232, 256
        %s234 = scalar_lea.vmem [#allocation3], %s233
        // Predicated region
        $region52: #{cnn_forward.3} parent=50 // pred_check
          %p235 = pneg %p62
        $region53: #{cnn_forward.3} parent=50 // pred_check_branch
          %237 = sbr.rel (%p235) target = $region55
        $region54: #{cnn_forward.3} parent=50 // pred_region
          _
        $region55: #{cnn_forward.3} parent=50 // pred_fallthru
          _
        %s238 = smul.u32 16, %s15
        %p239 = scmp.lt.s32.totalorder %s238, 319
        %s240 = scalar_select %p239, %s238, 319
        %s241 = smul.addr %s240, 2
        %s242 = scalar_lea.vmem %s0, %s241
        %p243 = pneg %p36
        %p244 = pneg %p33
        %s245 = sand.u32 %s49, 1
        %s246 = sand.u32 %s49, 1
        %s247 = smul.addr %s246, 256
        %s248 = scalar_lea.vmem [#allocation3], %s247
        %p249 = pneg %p62
        %p250 = pneg %p59
        %p251 = pneg %p83
        %p252 = pneg %p80
        %p253 = pneg %p104
        %p254 = pneg %p101
        %s255 = smul.u32 16, %s15
        %p256 = scmp.lt.s32.totalorder %s255, 319
        %s257 = scalar_select %p256, %s255, 319
        %s258 = smul.addr %s257, 2
        %s259 = scalar_lea.vmem %s0, %s258
        %s260 = smul.u32 16, %s15
        %s261 = smul.u32 16, %s15
        %p262 = scmp.eq.s32.totalorder %s15, 0
        // Predicated region
        $region56: #{cnn_forward.3} parent=50 // pred_check
          %p263 = pneg %p262
        $region57: #{cnn_forward.3} parent=50 // pred_check_branch
          %265 = sbr.rel (%p263) target = $region59
        $region58: #{cnn_forward.3} parent=50 // pred_region
          %vm266 = vcmask 74752
          %267 = vst.msk [vmem:[#allocation2] sm:$0x3] %vm266, 0.0
        $region59: #{cnn_forward.3} parent=50 // pred_fallthru
          _
        %v268 = vld [vmem:[#allocation2] sm:$0x3]
        %v269 = vld [vmem:[%s259] sm:$0xff]
        %v270 = vld [vmem:[%s259 + $0x8] sm:$0xff]
        %v271 = vld [vmem:[%s259 + $0x10] sm:$0xff]
        %v272 = vld [vmem:[%s259 + $0x18] sm:$0xff]
        %v273 = vld [vmem:[%s234] sm:$0xff]
        %v274 = vld [vmem:[%s234 + $0x8] sm:$0xff]
        %v275 = vld [vmem:[%s234 + $0x10] sm:$0xff]
        %v276 = vld [vmem:[%s234 + $0x18] sm:$0xff]
        %v277 = vld [vmem:[%s234 + $0x20] sm:$0xff]
        %v278 = vld [vmem:[%s234 + $0x28] sm:$0xff]
        %v279 = vld [vmem:[%s234 + $0x30] sm:$0xff]
        %v280 = vld [vmem:[%s234 + $0x38] sm:$0xff]
        %v281 = vld [vmem:[%s234 + $0x40] sm:$0xff]
        %v282 = vld [vmem:[%s234 + $0x48] sm:$0xff]
        %v283 = vld [vmem:[%s234 + $0x50] sm:$0xff]
        %v284 = vld [vmem:[%s234 + $0x58] sm:$0xff]
        %v285 = vld [vmem:[%s234 + $0x60] sm:$0xff]
        %v286 = vld [vmem:[%s234 + $0x68] sm:$0xff]
        %v287 = vld [vmem:[%s234 + $0x70] sm:$0xff]
        %v288 = vld [vmem:[%s234 + $0x78] sm:$0xff]
        %v289 = vld [vmem:[%s234 + $0x80] sm:$0x3]
        %v290 = vld [vmem:[%s234 + $0x88] sm:$0x3]
        %v291 = vld [vmem:[%s234 + $0x90] sm:$0x3]
        %v292 = vld [vmem:[%s234 + $0x98] sm:$0x3]
        %v293 = vld [vmem:[%s234 + $0xa0] sm:$0x3]
        %v294 = vld [vmem:[%s234 + $0xa8] sm:$0x3]
        %v295 = vld [vmem:[%s234 + $0xb0] sm:$0x3]
        %v296 = vld [vmem:[%s234 + $0xb8] sm:$0x3]
        %v297 = vld [vmem:[%s234 + $0xc0] sm:$0x3]
        %v298 = vld [vmem:[%s234 + $0xc8] sm:$0x3]
        %v299 = vld [vmem:[%s234 + $0xd0] sm:$0x3]
        %v300 = vld [vmem:[%s234 + $0xd8] sm:$0x3]
        %v301 = vld [vmem:[%s234 + $0xe0] sm:$0x3]
        %v302 = vld [vmem:[%s234 + $0xe8] sm:$0x3]
        %v303 = vld [vmem:[%s234 + $0xf0] sm:$0x3]
        %v304 = vld [vmem:[%s234 + $0xf8] sm:$0x3]
        %309 = vst [vmem:[#allocation1] ss:$4 sm:$0xff] %v269
        %s310 = scalar_lea.vmem [#allocation1], 32
        %311 = vst [vmem:[%s310] ss:$4 sm:$0xff] %v270
        %v312 = vld.sshfl [vmem:[#allocation1] sm:$0xff pattern:$0x73625140]
        %v313 = vld.sshfl [vmem:[#allocation1 + $0x8] sm:$0xff pattern:$0x73625140]
        %v314 = vld.sshfl [vmem:[#allocation1 + $0x10] sm:$0xff pattern:$0x73625140]
        %v315 = vld.sshfl [vmem:[#allocation1 + $0x18] sm:$0xff pattern:$0x73625140]
        %v316 = vld.sshfl [vmem:[#allocation1 + $0x20] sm:$0xff pattern:$0x73625140]
        %v317 = vld.sshfl [vmem:[#allocation1 + $0x28] sm:$0xff pattern:$0x73625140]
        %v318 = vld.sshfl [vmem:[#allocation1 + $0x30] sm:$0xff pattern:$0x73625140]
        %v319 = vld.sshfl [vmem:[#allocation1 + $0x38] sm:$0xff pattern:$0x73625140]
        %320 = vst [vmem:[#allocation1] ss:$4 sm:$0xff] %v271
        %321 = vst [vmem:[%s310] ss:$4 sm:$0xff] %v272
        %v322 = vld.sshfl [vmem:[#allocation1] sm:$0xff pattern:$0x73625140]
        %v323 = vld.sshfl [vmem:[#allocation1 + $0x8] sm:$0xff pattern:$0x73625140]
        %v324 = vld.sshfl [vmem:[#allocation1 + $0x10] sm:$0xff pattern:$0x73625140]
        %v325 = vld.sshfl [vmem:[#allocation1 + $0x18] sm:$0xff pattern:$0x73625140]
        %v326 = vld.sshfl [vmem:[#allocation1 + $0x20] sm:$0xff pattern:$0x73625140]
        %v327 = vld.sshfl [vmem:[#allocation1 + $0x28] sm:$0xff pattern:$0x73625140]
        %v328 = vld.sshfl [vmem:[#allocation1 + $0x30] sm:$0xff pattern:$0x73625140]
        %v329 = vld.sshfl [vmem:[#allocation1 + $0x38] sm:$0xff pattern:$0x73625140]
        %346 = vmatpush.xpose.msra.mxu0 0.0
        %347 = vmatpush.xpose.msra.mxu0 0.0
        %348 = vmatpush.xpose.msra.mxu0 0.0
        %349 = vmatpush.xpose.msra.mxu0 0.0
        %350 = vmatpush.xpose.msra.mxu0 0.0
        %351 = vmatpush.xpose.msra.mxu0 0.0
        %352 = vmatpush.xpose.msra.mxu0 0.0
        %353 = vmatpush.xpose.msra.mxu0 0.0
        %354 = vmatpush.xpose.msra.mxu0 0.0
        %355 = vmatpush.xpose.msra.mxu0 0.0
        %356 = vmatpush.xpose.msra.mxu0 0.0
        %357 = vmatpush.xpose.msra.mxu0 0.0
        %358 = vmatpush.xpose.msra.mxu0 0.0
        %359 = vmatpush.xpose.msra.mxu0 0.0
        %360 = vmatpush.xpose.msra.mxu0 %v289
        %361 = vmatpush.xpose.msra.mxu0 %v273
        %362 = vmatmul.f32.gmra.mxu0 %v312
        %v363 = vpop.f32.mrf.mxu0
        %v364 = vadd.f32 0.0, %v363
        %365 = vdwg.mxu0
        %366 = vmatpush.xpose.msra.mxu0 0.0
        %367 = vmatpush.xpose.msra.mxu0 0.0
        %368 = vmatpush.xpose.msra.mxu0 0.0
        %369 = vmatpush.xpose.msra.mxu0 0.0
        %370 = vmatpush.xpose.msra.mxu0 0.0
        %371 = vmatpush.xpose.msra.mxu0 0.0
        %372 = vmatpush.xpose.msra.mxu0 0.0
        %373 = vmatpush.xpose.msra.mxu0 0.0
        %374 = vmatpush.xpose.msra.mxu0 0.0
        %375 = vmatpush.xpose.msra.mxu0 0.0
        %376 = vmatpush.xpose.msra.mxu0 0.0
        %377 = vmatpush.xpose.msra.mxu0 0.0
        %378 = vmatpush.xpose.msra.mxu0 0.0
        %379 = vmatpush.xpose.msra.mxu0 0.0
        %380 = vmatpush.xpose.msra.mxu0 %v290
        %381 = vmatpush.xpose.msra.mxu0 %v274
        %382 = vmatmul.f32.gmra.mxu0 %v313
        %v383 = vpop.f32.mrf.mxu0
        %v384 = vadd.f32 %v364, %v383
        %385 = vdwg.mxu0
        %386 = vmatpush.xpose.msra.mxu0 0.0
        %387 = vmatpush.xpose.msra.mxu0 0.0
        %388 = vmatpush.xpose.msra.mxu0 0.0
        %389 = vmatpush.xpose.msra.mxu0 0.0
        %390 = vmatpush.xpose.msra.mxu0 0.0
        %391 = vmatpush.xpose.msra.mxu0 0.0
        %392 = vmatpush.xpose.msra.mxu0 0.0
        %393 = vmatpush.xpose.msra.mxu0 0.0
        %394 = vmatpush.xpose.msra.mxu0 0.0
        %395 = vmatpush.xpose.msra.mxu0 0.0
        %396 = vmatpush.xpose.msra.mxu0 0.0
        %397 = vmatpush.xpose.msra.mxu0 0.0
        %398 = vmatpush.xpose.msra.mxu0 0.0
        %399 = vmatpush.xpose.msra.mxu0 0.0
        %400 = vmatpush.xpose.msra.mxu0 %v291
        %401 = vmatpush.xpose.msra.mxu0 %v275
        %402 = vmatmul.f32.gmra.mxu0 %v314
        %v403 = vpop.f32.mrf.mxu0
        %v404 = vadd.f32 %v384, %v403
        %405 = vdwg.mxu0
        %406 = vmatpush.xpose.msra.mxu0 0.0
        %407 = vmatpush.xpose.msra.mxu0 0.0
        %408 = vmatpush.xpose.msra.mxu0 0.0
        %409 = vmatpush.xpose.msra.mxu0 0.0
        %410 = vmatpush.xpose.msra.mxu0 0.0
        %411 = vmatpush.xpose.msra.mxu0 0.0
        %412 = vmatpush.xpose.msra.mxu0 0.0
        %413 = vmatpush.xpose.msra.mxu0 0.0
        %414 = vmatpush.xpose.msra.mxu0 0.0
        %415 = vmatpush.xpose.msra.mxu0 0.0
        %416 = vmatpush.xpose.msra.mxu0 0.0
        %417 = vmatpush.xpose.msra.mxu0 0.0
        %418 = vmatpush.xpose.msra.mxu0 0.0
        %419 = vmatpush.xpose.msra.mxu0 0.0
        %420 = vmatpush.xpose.msra.mxu0 %v292
        %421 = vmatpush.xpose.msra.mxu0 %v276
        %422 = vmatmul.f32.gmra.mxu0 %v315
        %v423 = vpop.f32.mrf.mxu0
        %v424 = vadd.f32 %v404, %v423
        %425 = vdwg.mxu0
        %426 = vmatpush.xpose.msra.mxu0 0.0
        %427 = vmatpush.xpose.msra.mxu0 0.0
        %428 = vmatpush.xpose.msra.mxu0 0.0
        %429 = vmatpush.xpose.msra.mxu0 0.0
        %430 = vmatpush.xpose.msra.mxu0 0.0
        %431 = vmatpush.xpose.msra.mxu0 0.0
        %432 = vmatpush.xpose.msra.mxu0 0.0
        %433 = vmatpush.xpose.msra.mxu0 0.0
        %434 = vmatpush.xpose.msra.mxu0 0.0
        %435 = vmatpush.xpose.msra.mxu0 0.0
        %436 = vmatpush.xpose.msra.mxu0 0.0
        %437 = vmatpush.xpose.msra.mxu0 0.0
        %438 = vmatpush.xpose.msra.mxu0 0.0
        %439 = vmatpush.xpose.msra.mxu0 0.0
        %440 = vmatpush.xpose.msra.mxu0 %v293
        %441 = vmatpush.xpose.msra.mxu0 %v277
        %442 = vmatmul.f32.gmra.mxu0 %v316
        %v443 = vpop.f32.mrf.mxu0
        %v444 = vadd.f32 %v424, %v443
        %445 = vdwg.mxu0
        %446 = vmatpush.xpose.msra.mxu0 0.0
        %447 = vmatpush.xpose.msra.mxu0 0.0
        %448 = vmatpush.xpose.msra.mxu0 0.0
        %449 = vmatpush.xpose.msra.mxu0 0.0
        %450 = vmatpush.xpose.msra.mxu0 0.0
        %451 = vmatpush.xpose.msra.mxu0 0.0
        %452 = vmatpush.xpose.msra.mxu0 0.0
        %453 = vmatpush.xpose.msra.mxu0 0.0
        %454 = vmatpush.xpose.msra.mxu0 0.0
        %455 = vmatpush.xpose.msra.mxu0 0.0
        %456 = vmatpush.xpose.msra.mxu0 0.0
        %457 = vmatpush.xpose.msra.mxu0 0.0
        %458 = vmatpush.xpose.msra.mxu0 0.0
        %459 = vmatpush.xpose.msra.mxu0 0.0
        %460 = vmatpush.xpose.msra.mxu0 %v294
        %461 = vmatpush.xpose.msra.mxu0 %v278
        %462 = vmatmul.f32.gmra.mxu0 %v317
        %v463 = vpop.f32.mrf.mxu0
        %v464 = vadd.f32 %v444, %v463
        %465 = vdwg.mxu0
        %466 = vmatpush.xpose.msra.mxu0 0.0
        %467 = vmatpush.xpose.msra.mxu0 0.0
        %468 = vmatpush.xpose.msra.mxu0 0.0
        %469 = vmatpush.xpose.msra.mxu0 0.0
        %470 = vmatpush.xpose.msra.mxu0 0.0
        %471 = vmatpush.xpose.msra.mxu0 0.0
        %472 = vmatpush.xpose.msra.mxu0 0.0
        %473 = vmatpush.xpose.msra.mxu0 0.0
        %474 = vmatpush.xpose.msra.mxu0 0.0
        %475 = vmatpush.xpose.msra.mxu0 0.0
        %476 = vmatpush.xpose.msra.mxu0 0.0
        %477 = vmatpush.xpose.msra.mxu0 0.0
        %478 = vmatpush.xpose.msra.mxu0 0.0
        %479 = vmatpush.xpose.msra.mxu0 0.0
        %480 = vmatpush.xpose.msra.mxu0 %v295
        %481 = vmatpush.xpose.msra.mxu0 %v279
        %482 = vmatmul.f32.gmra.mxu0 %v318
        %v483 = vpop.f32.mrf.mxu0
        %v484 = vadd.f32 %v464, %v483
        %485 = vdwg.mxu0
        %486 = vmatpush.xpose.msra.mxu0 0.0
        %487 = vmatpush.xpose.msra.mxu0 0.0
        %488 = vmatpush.xpose.msra.mxu0 0.0
        %489 = vmatpush.xpose.msra.mxu0 0.0
        %490 = vmatpush.xpose.msra.mxu0 0.0
        %491 = vmatpush.xpose.msra.mxu0 0.0
        %492 = vmatpush.xpose.msra.mxu0 0.0
        %493 = vmatpush.xpose.msra.mxu0 0.0
        %494 = vmatpush.xpose.msra.mxu0 0.0
        %495 = vmatpush.xpose.msra.mxu0 0.0
        %496 = vmatpush.xpose.msra.mxu0 0.0
        %497 = vmatpush.xpose.msra.mxu0 0.0
        %498 = vmatpush.xpose.msra.mxu0 0.0
        %499 = vmatpush.xpose.msra.mxu0 0.0
        %500 = vmatpush.xpose.msra.mxu0 %v296
        %501 = vmatpush.xpose.msra.mxu0 %v280
        %502 = vmatmul.f32.gmra.mxu0 %v319
        %v503 = vpop.f32.mrf.mxu0
        %v504 = vadd.f32 %v484, %v503
        %505 = vdwg.mxu0
        %506 = vmatpush.xpose.msra.mxu0 0.0
        %507 = vmatpush.xpose.msra.mxu0 0.0
        %508 = vmatpush.xpose.msra.mxu0 0.0
        %509 = vmatpush.xpose.msra.mxu0 0.0
        %510 = vmatpush.xpose.msra.mxu0 0.0
        %511 = vmatpush.xpose.msra.mxu0 0.0
        %512 = vmatpush.xpose.msra.mxu0 0.0
        %513 = vmatpush.xpose.msra.mxu0 0.0
        %514 = vmatpush.xpose.msra.mxu0 0.0
        %515 = vmatpush.xpose.msra.mxu0 0.0
        %516 = vmatpush.xpose.msra.mxu0 0.0
        %517 = vmatpush.xpose.msra.mxu0 0.0
        %518 = vmatpush.xpose.msra.mxu0 0.0
        %519 = vmatpush.xpose.msra.mxu0 0.0
        %520 = vmatpush.xpose.msra.mxu0 %v297
        %521 = vmatpush.xpose.msra.mxu0 %v281
        %522 = vmatmul.f32.gmra.mxu0 %v322
        %v523 = vpop.f32.mrf.mxu0
        %v524 = vadd.f32 %v504, %v523
        %525 = vdwg.mxu0
        %526 = vmatpush.xpose.msra.mxu0 0.0
        %527 = vmatpush.xpose.msra.mxu0 0.0
        %528 = vmatpush.xpose.msra.mxu0 0.0
        %529 = vmatpush.xpose.msra.mxu0 0.0
        %530 = vmatpush.xpose.msra.mxu0 0.0
        %531 = vmatpush.xpose.msra.mxu0 0.0
        %532 = vmatpush.xpose.msra.mxu0 0.0
        %533 = vmatpush.xpose.msra.mxu0 0.0
        %534 = vmatpush.xpose.msra.mxu0 0.0
        %535 = vmatpush.xpose.msra.mxu0 0.0
        %536 = vmatpush.xpose.msra.mxu0 0.0
        %537 = vmatpush.xpose.msra.mxu0 0.0
        %538 = vmatpush.xpose.msra.mxu0 0.0
        %539 = vmatpush.xpose.msra.mxu0 0.0
        %540 = vmatpush.xpose.msra.mxu0 %v298
        %541 = vmatpush.xpose.msra.mxu0 %v282
        %542 = vmatmul.f32.gmra.mxu0 %v323
        %v543 = vpop.f32.mrf.mxu0
        %v544 = vadd.f32 %v524, %v543
        %545 = vdwg.mxu0
        %546 = vmatpush.xpose.msra.mxu0 0.0
        %547 = vmatpush.xpose.msra.mxu0 0.0
        %548 = vmatpush.xpose.msra.mxu0 0.0
        %549 = vmatpush.xpose.msra.mxu0 0.0
        %550 = vmatpush.xpose.msra.mxu0 0.0
        %551 = vmatpush.xpose.msra.mxu0 0.0
        %552 = vmatpush.xpose.msra.mxu0 0.0
        %553 = vmatpush.xpose.msra.mxu0 0.0
        %554 = vmatpush.xpose.msra.mxu0 0.0
        %555 = vmatpush.xpose.msra.mxu0 0.0
        %556 = vmatpush.xpose.msra.mxu0 0.0
        %557 = vmatpush.xpose.msra.mxu0 0.0
        %558 = vmatpush.xpose.msra.mxu0 0.0
        %559 = vmatpush.xpose.msra.mxu0 0.0
        %560 = vmatpush.xpose.msra.mxu0 %v299
        %561 = vmatpush.xpose.msra.mxu0 %v283
        %562 = vmatmul.f32.gmra.mxu0 %v324
        %v563 = vpop.f32.mrf.mxu0
        %v564 = vadd.f32 %v544, %v563
        %565 = vdwg.mxu0
        %566 = vmatpush.xpose.msra.mxu0 0.0
        %567 = vmatpush.xpose.msra.mxu0 0.0
        %568 = vmatpush.xpose.msra.mxu0 0.0
        %569 = vmatpush.xpose.msra.mxu0 0.0
        %570 = vmatpush.xpose.msra.mxu0 0.0
        %571 = vmatpush.xpose.msra.mxu0 0.0
        %572 = vmatpush.xpose.msra.mxu0 0.0
        %573 = vmatpush.xpose.msra.mxu0 0.0
        %574 = vmatpush.xpose.msra.mxu0 0.0
        %575 = vmatpush.xpose.msra.mxu0 0.0
        %576 = vmatpush.xpose.msra.mxu0 0.0
        %577 = vmatpush.xpose.msra.mxu0 0.0
        %578 = vmatpush.xpose.msra.mxu0 0.0
        %579 = vmatpush.xpose.msra.mxu0 0.0
        %580 = vmatpush.xpose.msra.mxu0 %v300
        %581 = vmatpush.xpose.msra.mxu0 %v284
        %582 = vmatmul.f32.gmra.mxu0 %v325
        %v583 = vpop.f32.mrf.mxu0
        %v584 = vadd.f32 %v564, %v583
        %585 = vdwg.mxu0
        %586 = vmatpush.xpose.msra.mxu0 0.0
        %587 = vmatpush.xpose.msra.mxu0 0.0
        %588 = vmatpush.xpose.msra.mxu0 0.0
        %589 = vmatpush.xpose.msra.mxu0 0.0
        %590 = vmatpush.xpose.msra.mxu0 0.0
        %591 = vmatpush.xpose.msra.mxu0 0.0
        %592 = vmatpush.xpose.msra.mxu0 0.0
        %593 = vmatpush.xpose.msra.mxu0 0.0
        %594 = vmatpush.xpose.msra.mxu0 0.0
        %595 = vmatpush.xpose.msra.mxu0 0.0
        %596 = vmatpush.xpose.msra.mxu0 0.0
        %597 = vmatpush.xpose.msra.mxu0 0.0
        %598 = vmatpush.xpose.msra.mxu0 0.0
        %599 = vmatpush.xpose.msra.mxu0 0.0
        %600 = vmatpush.xpose.msra.mxu0 %v301
        %601 = vmatpush.xpose.msra.mxu0 %v285
        %602 = vmatmul.f32.gmra.mxu0 %v326
        %v603 = vpop.f32.mrf.mxu0
        %v604 = vadd.f32 %v584, %v603
        %605 = vdwg.mxu0
        %606 = vmatpush.xpose.msra.mxu0 0.0
        %607 = vmatpush.xpose.msra.mxu0 0.0
        %608 = vmatpush.xpose.msra.mxu0 0.0
        %609 = vmatpush.xpose.msra.mxu0 0.0
        %610 = vmatpush.xpose.msra.mxu0 0.0
        %611 = vmatpush.xpose.msra.mxu0 0.0
        %612 = vmatpush.xpose.msra.mxu0 0.0
        %613 = vmatpush.xpose.msra.mxu0 0.0
        %614 = vmatpush.xpose.msra.mxu0 0.0
        %615 = vmatpush.xpose.msra.mxu0 0.0
        %616 = vmatpush.xpose.msra.mxu0 0.0
        %617 = vmatpush.xpose.msra.mxu0 0.0
        %618 = vmatpush.xpose.msra.mxu0 0.0
        %619 = vmatpush.xpose.msra.mxu0 0.0
        %620 = vmatpush.xpose.msra.mxu0 %v302
        %621 = vmatpush.xpose.msra.mxu0 %v286
        %622 = vmatmul.f32.gmra.mxu0 %v327
        %v623 = vpop.f32.mrf.mxu0
        %v624 = vadd.f32 %v604, %v623
        %625 = vdwg.mxu0
        %626 = vmatpush.xpose.msra.mxu0 0.0
        %627 = vmatpush.xpose.msra.mxu0 0.0
        %628 = vmatpush.xpose.msra.mxu0 0.0
        %629 = vmatpush.xpose.msra.mxu0 0.0
        %630 = vmatpush.xpose.msra.mxu0 0.0
        %631 = vmatpush.xpose.msra.mxu0 0.0
        %632 = vmatpush.xpose.msra.mxu0 0.0
        %633 = vmatpush.xpose.msra.mxu0 0.0
        %634 = vmatpush.xpose.msra.mxu0 0.0
        %635 = vmatpush.xpose.msra.mxu0 0.0
        %636 = vmatpush.xpose.msra.mxu0 0.0
        %637 = vmatpush.xpose.msra.mxu0 0.0
        %638 = vmatpush.xpose.msra.mxu0 0.0
        %639 = vmatpush.xpose.msra.mxu0 0.0
        %640 = vmatpush.xpose.msra.mxu0 %v303
        %641 = vmatpush.xpose.msra.mxu0 %v287
        %642 = vmatmul.f32.gmra.mxu0 %v328
        %v643 = vpop.f32.mrf.mxu0
        %v644 = vadd.f32 %v624, %v643
        %645 = vdwg.mxu0
        %646 = vmatpush.xpose.msra.mxu0 0.0
        %647 = vmatpush.xpose.msra.mxu0 0.0
        %648 = vmatpush.xpose.msra.mxu0 0.0
        %649 = vmatpush.xpose.msra.mxu0 0.0
        %650 = vmatpush.xpose.msra.mxu0 0.0
        %651 = vmatpush.xpose.msra.mxu0 0.0
        %652 = vmatpush.xpose.msra.mxu0 0.0
        %653 = vmatpush.xpose.msra.mxu0 0.0
        %654 = vmatpush.xpose.msra.mxu0 0.0
        %655 = vmatpush.xpose.msra.mxu0 0.0
        %656 = vmatpush.xpose.msra.mxu0 0.0
        %657 = vmatpush.xpose.msra.mxu0 0.0
        %658 = vmatpush.xpose.msra.mxu0 0.0
        %659 = vmatpush.xpose.msra.mxu0 0.0
        %660 = vmatpush.xpose.msra.mxu0 %v304
        %661 = vmatpush.xpose.msra.mxu0 %v288
        %662 = vmatmul.f32.gmra.mxu0 %v329
        %v663 = vpop.f32.mrf.mxu0
        %v664 = vadd.f32 %v644, %v663
        %665 = vdwg.mxu0
        %v666 = vadd.f32 %v268, %v664
        %vm667 = vcmask 74752
        %668 = vst.msk [vmem:[#allocation2] sm:$0x3] %vm667, %v666
        %p669 = scmp.eq.s32.totalorder %s15, 19
        // Predicated region
        $region60: #{cnn_forward.3} parent=50 // pred_check
          %p670 = pneg %p669
        $region61: #{cnn_forward.3} parent=50 // pred_check_branch
          %672 = sbr.rel (%p670) target = $region63
        $region62: #{cnn_forward.3} parent=50 // pred_region
          %v673 = vld [vmem:[#allocation2] sm:$0x3]
          %v674 = vld [vmem:[%s2] sm:$0x1]
          %v676 = vperm.slane %v674, 0
          %v678 = vadd.f32 %v673, %v676
          %679 = vst.msk [vmem:[#allocation4] sm:$0x3] %vm667, %v678
        $region63: #{cnn_forward.3} parent=50 // pred_fallthru
          _
        // Predicated region
        $region64: #{cnn_forward.3} parent=50 // pred_check
          %p680 = pneg %p101
        $region65: #{cnn_forward.3} parent=50 // pred_check_branch
          %682 = sbr.rel (%p680) target = $region67
        $region66: #{cnn_forward.3} parent=50 // pred_region
          %684 = vsyncadd [#allocation5], 0
          %s686 = sshll.u32 [#allocation4], 4
          %s687 = int_to_ptr.vmem [resolvable:$true] %s686
          %s688 = sshll.u32 %s3, 4
          %s689 = int_to_ptr.hbm [resolvable:$true] %s688
          %691 = dma.vmem_to_hbm [thread:$0]  %s687, 32, %s689, [#allocation5]
        $region67: #{cnn_forward.3} parent=50 // pred_fallthru
          _
        // Predicated region
        $region68: #{cnn_forward.3} parent=50 // pred_check
          %p692 = pneg %p101
        $region69: #{cnn_forward.3} parent=50 // pred_check_branch
          %694 = sbr.rel (%p692) target = $region71
        $region70: #{cnn_forward.3} parent=50 // pred_region
          %696 = dma.done [#allocation5], 32
        $region71: #{cnn_forward.3} parent=50 // pred_fallthru
          _
      $region51: #{cnn_forward.3} parent=5 // pred_fallthru
        _
      %p697 = scmp.le.s32.totalorder 2, %s10
      // Predicated region
      $region72: #{cnn_forward.3} parent=5 // pred_check
        %p698 = pneg %p697
      $region73: #{cnn_forward.3} parent=5 // pred_check_branch
        %700 = sbr.rel (%p698) target = $region75
      $region74: #{cnn_forward.3} parent=5 // pred_region
        %s701 = ssub.s32 %s10, 2
      $region75: #{cnn_forward.3} parent=5 // pred_fallthru
        _
    $region6: #{cnn_forward.3} parent=1 // loop_footer
      %s14 = sadd.s32 1, %s10
    $region7: #{cnn_forward.3} parent=1 // loop_footer_branch
      %9 = sbr.rel target = $region3
    $region8: #{cnn_forward.3} parent=1 // loop_exit
      _
    %702 = vsyncpa [#allocation5], 1
    %s703 = scalar_lea.sflag [#allocation5], 1
    %704 = vsyncpa %s703, 1

</llo_original>
